<compile_context>
chip_gen: v6e
topology: v6e:2x2x1
jax: 0.10.0
libtpu: 0.0.40
codegen_flags: <defaults>
</compile_context>

<pallas_src>
import functools

import jax
import jax.numpy as jnp
import numpy as np
from jax import lax
from jax.experimental import pallas as pl
from jax.experimental.pallas import tpu as pltpu


def _round_up(v, m):
    return (v + m - 1) // m * m


def _make_tap_mask_slab(H, W, cpad):
    """(9*cpad, H*W) 0/1 slab: tap-t boundary-validity mask replicated over the
    cpad channel rows of tap t (center tap rows == 1).  Applied with one
    aligned elementwise multiply per layer."""
    HW = H * W
    rows = np.arange(HW) // W
    cols = np.arange(HW) % W
    slab = np.empty((9, cpad, HW), np.float32)
    t = 0
    for dy in (-1, 0, 1):
        for dx in (-1, 0, 1):
            valid = ((rows + dy >= 0) & (rows + dy < H) &
                     (cols + dx >= 0) & (cols + dx < W)).astype(np.float32)
            slab[t] = valid[None, :]
            t += 1
    return jnp.asarray(slab.reshape(9 * cpad, HW))


# ----------------------------------------------------------------------------
# Pallas kernel: one grid step == B_blk batch samples, all layers fused.
# ----------------------------------------------------------------------------
def _gin_kernel(mask_ref, x_ref, ker_ref, shift_ref, alpha_ref, out_ref, *,
                layer_cfgs, H, W, cpad, B_blk):
    HW = H * W
    b = pl.program_id(0)

    def conv_layer(act, l, s, use_act):
        # 9 shifted copies (XLU rolls), one masked (9*cpad, HW) slab, one matmul.
        parts = []
        for t in range(9):
            dy, dx = t // 3 - 1, t % 3 - 1
            sh_amt = (-(dy * W + dx)) % HW      # shifted[p] = act[(p + dy*W + dx) % HW]
            parts.append(act if sh_amt == 0 else pltpu.roll(act, shift=sh_amt, axis=1))
        slab = jnp.concatenate(parts, axis=0) * mask_ref[...]      # (9*cpad, HW)
        y = jnp.dot(ker_ref[s, l], slab,
                    preferred_element_type=jnp.float32)            # (cpad, HW)
        y = y + shift_ref[s, l]                                    # (cpad, 1) bias
        if use_act:
            y = jnp.maximum(y, 0.01 * y)                           # leaky_relu(0.01)
        return y

    for s in range(B_blk):                                         # static, small unroll
        x_in = x_ref[s]                                            # (cpad, HW); rows >= C are 0
        act = x_in
        for l, (_, _, use_act) in enumerate(layer_cfgs):
            act = conv_layer(act, l, s, use_act)

        # Epilogue over FULL cpad rows (padded rows are provably zero, so the
        # Frobenius sums and the mixed result are unchanged).
        alpha = alpha_ref[b * B_blk + s]                           # scalar from SMEM
        mixed = alpha * act + (1.0 - alpha) * x_in                 # (cpad, HW)
        ss_in = jnp.sum(x_in * x_in, keepdims=True)                # (1, 1)
        ss_mx = jnp.sum(mixed * mixed, keepdims=True)              # (1, 1)
        scale = jnp.sqrt(ss_in) * lax.rsqrt(ss_mx + 1e-5)
        out_ref[s] = mixed * scale                                 # dense (8, 256) store


# ----------------------------------------------------------------------------
# Chip-aware batch blocking.
# ----------------------------------------------------------------------------
def _num_tensorcores():
    try:
        info = pltpu.get_tpu_info()
        for attr in ("num_cores", "core_count", "tensor_core_count", "num_tensorcores"):
            v = getattr(info, attr, None)
            if isinstance(v, (int, np.integer)) and 0 < int(v) <= 8:
                return int(v)
    except Exception:
        pass
    try:
        kind = jax.devices()[0].device_kind.lower()
        if ("v4" in kind) or ("v5p" in kind) or ("v7" in kind):
            return 2                       # megacore / dual-TC parts
    except Exception:
        pass
    return 1                               # v5e / v6e: single TensorCore


def _pick_batch_block(nb, n_cores):
    if nb <= 1:
        return 1
    if n_cores <= 1:
        # Single TC: fewest grid steps (per-step overhead dominates), unroll <= 8.
        for blk in (8, 4, 2, 1):
            if nb % blk == 0:
                return blk
        return 1
    # Multi-TC (v7x): >= 2 grid steps, step count a multiple of n_cores, unroll <= 4.
    for blk in (4, 2, 1):
        if nb % blk == 0 and (nb // blk) >= 2 and (nb // blk) % n_cores == 0:
            return blk
    return 1


# ----------------------------------------------------------------------------
# Wrapper: layout packing, BlockSpecs, pallas_call.
# ----------------------------------------------------------------------------
def gin_group_conv(x, kers_flat, shifts, alphas, layer_cfgs):
    """x: (nb, C, H, W). kers_flat[l]: (nb*cout_l, cin_l, 3, 3) (sample-major),
    shifts[l]: (nb*cout_l,), alphas: (nb,). Returns (nb, C, H, W)."""
    if isinstance(x, (list, tuple)):
        x = jnp.concatenate(x, axis=0)
    # TODO(synk): 3d (NCDHW) mode of the torch module is not implemented; 2d only.
    nb, C, H, W = x.shape
    HW = H * W
    n_layer = len(layer_cfgs)
    cpad = _round_up(max(max(ci, co) for ci, co, _ in layer_cfgs), 8)

    # Lane-dense flattened input, channels zero-padded to cpad.
    x_flat = jnp.pad(x.reshape(nb, C, HW), ((0, 0), (0, cpad - C), (0, 0)))

    # Repack weights/shifts to matmul-ready layouts (one-time wrapper transposes).
    # INVARIANT (relied on by the full-cpad epilogue): padded weight ROWS
    # (out-channel >= cout) and padded shift rows are ZERO for every layer.
    wk_list, sh_list = [], []
    for (cin, cout, _), w33, sh in zip(layer_cfgs, kers_flat, shifts):
        wk = w33.reshape(nb, cout, cin, 3, 3)
        wk = jnp.transpose(wk, (0, 1, 3, 4, 2))                       # (nb,cout,3,3,cin)
        wk = jnp.pad(wk, ((0, 0), (0, cpad - cout), (0, 0), (0, 0), (0, cpad - cin)))
        wk_list.append(wk.reshape(nb, cpad, 9 * cpad))
        sh_list.append(jnp.pad(sh.reshape(nb, cout), ((0, 0), (0, cpad - cout))))
    ker_all = jnp.stack(wk_list, axis=1)                              # (nb, L, cpad, 9*cpad)
    shift_all = jnp.stack(sh_list, axis=1)[..., None]                 # (nb, L, cpad, 1)
    alphas_s = alphas.reshape(nb).astype(jnp.float32)                 # SMEM scalars

    masks = _make_tap_mask_slab(H, W, cpad)                           # (9*cpad, HW)

    n_cores = _num_tensorcores()
    B_blk = _pick_batch_block(nb, n_cores)

    # VMEM-aware guard: per-step operand footprint (x2 double-buffer) must stay
    # well under the scoped VMEM default on every chip (v7x has only 64 MiB).
    def _step_bytes(blk):
        per = blk * (cpad * HW + n_layer * cpad * 9 * cpad + n_layer * cpad + cpad * HW)
        return 2 * per * 4 + 9 * cpad * HW * 4
    while B_blk > 1 and _step_bytes(B_blk) > (12 << 20):
        B_blk -= 1
        while B_blk > 1 and nb % B_blk != 0:
            B_blk -= 1

    grid = (nb // B_blk,)

    kernel = functools.partial(_gin_kernel, layer_cfgs=tuple(layer_cfgs),
                               H=H, W=W, cpad=cpad, B_blk=B_blk)
    out_flat = pl.pallas_call(
        kernel,
        out_shape=jax.ShapeDtypeStruct((nb, cpad, HW), jnp.float32),
        grid_spec=pltpu.PrefetchScalarGridSpec(
            num_scalar_prefetch=0,
            grid=grid,
            in_specs=[
                pl.BlockSpec((9 * cpad, HW), lambda b: (0, 0)),                    # mask slab
                pl.BlockSpec((B_blk, cpad, HW), lambda b: (b, 0, 0)),              # x
                pl.BlockSpec((B_blk, n_layer, cpad, 9 * cpad),
                             lambda b: (b, 0, 0, 0)),                              # weights
                pl.BlockSpec((B_blk, n_layer, cpad, 1), lambda b: (b, 0, 0, 0)),   # shifts
                pl.BlockSpec(memory_space=pltpu.MemorySpace.SMEM),                 # alphas
            ],
            out_specs=pl.BlockSpec((B_blk, cpad, HW), lambda b: (b, 0, 0)),
        ),
        compiler_params=pltpu.CompilerParams(
            dimension_semantics=("parallel",)),
    )(masks, x_flat, ker_all, shift_all, alphas_s)
    return out_flat[:, :C, :].reshape(nb, C, H, W)


# ----------------------------------------------------------------------------
# Deterministic parameter construction (mirrors the torch module's per-forward
# random draws: randn kernels, randn shifts, rand alphas, k in {1, 3}).
# ----------------------------------------------------------------------------
def init_gin_params(key, nb, in_channels, interm_channels, n_layer, scale_pool=(1, 3)):
    layer_cfgs = ([(in_channels, interm_channels, True)]
                  + [(interm_channels, interm_channels, True)] * (n_layer - 2)
                  + [(interm_channels, in_channels, False)])
    ksize_rng = np.random.default_rng(0)     # host-side k choice (jit-safe)
    kers_flat, shifts = [], []
    for (cin, cout, _) in layer_cfgs:
        key, k_w, k_s = jax.random.split(key, 3)
        ksize = int(scale_pool[int(ksize_rng.integers(0, len(scale_pool)))])
        w = jax.random.normal(k_w, (nb * cout, cin, ksize, ksize), jnp.float32)
        if ksize == 1:   # 1x1 kernel centered in a zero 3x3 == identical conv output
            w33 = jnp.zeros((nb * cout, cin, 3, 3), jnp.float32)
            w33 = w33.at[:, :, 1, 1].set(w[:, :, 0, 0])
        else:
            w33 = w
        kers_flat.append(w33)
        shifts.append(jax.random.normal(k_s, (nb * cout,), jnp.float32))
    key, k_a = jax.random.split(key)
    alphas = jax.random.uniform(k_a, (nb,), jnp.float32)
    return layer_cfgs, kers_flat, shifts, alphas


# ----------------------------------------------------------------------------
# Pure-JAX reference (grouped conv) for validation.
# ----------------------------------------------------------------------------
def gin_reference(x, kers_flat, shifts, alphas, layer_cfgs):
    nb, nc, H, W = x.shape
    h = x
    for (cin, cout, use_act), ker, shift in zip(layer_cfgs, kers_flat, shifts):
        xi = h.reshape(1, nb * cin, H, W)
        y = lax.conv_general_dilated(
            xi, ker, window_strides=(1, 1), padding=((1, 1), (1, 1)),
            dimension_numbers=('NCHW', 'OIHW', 'NCHW'),
            feature_group_count=nb)
        y = y + shift.reshape(1, nb * cout, 1, 1)
        if use_act:
            y = jnp.where(y >= 0, y, 0.01 * y)
        h = y.reshape(nb, cout, H, W)
    a = alphas.reshape(nb, 1, 1, 1)
    mixed = a * h + (1.0 - a) * x
    in_frob = jnp.sqrt(jnp.sum(x * x, axis=(1, 2, 3), keepdims=True))
    self_frob = jnp.sqrt(jnp.sum(mixed * mixed, axis=(1, 2, 3), keepdims=True))
    return mixed * (1.0 / (self_frob + 1e-5)) * in_frob


if __name__ == "__main__":
    key = jax.random.PRNGKey(0)
    # cfg: IN_CHANNELS=4, INTERM_CHANNELS=8, N_LAYER=4 ; x: [nb, nc, nx, ny]
    nb, nc, H, W = 2, 4, 16, 16
    n_layer, interm = 4, 8

    key, kx = jax.random.split(key)
    x = jax.random.normal(kx, (nb, nc, H, W), jnp.float32)

    layer_cfgs, kers_flat, shifts, alphas = init_gin_params(key, nb, nc, interm, n_layer)

    out = gin_group_conv(x, kers_flat, shifts, alphas, layer_cfgs)
    out = jax.block_until_ready(out)

    ref = gin_reference(x, kers_flat, shifts, alphas, layer_cfgs)
    ref = jax.block_until_ready(ref)

    np.testing.assert_allclose(np.asarray(out), np.asarray(ref),
                               rtol=5e-2, atol=5e-2)
    print("KERNEL_OK")
</pallas_src>

<mosaic_0001>
module attributes {stable_mosaic.version = 11 : i64} {
  func.func @_gin_kernel(%arg0: i32, %arg1: memref<72x256xf32, #tpu.memory_space<vmem>>, %arg2: memref<2x8x256xf32, #tpu.memory_space<vmem>>, %arg3: memref<2x4x8x72xf32, #tpu.memory_space<vmem>>, %arg4: memref<2x4x8x1xf32, #tpu.memory_space<vmem>>, %arg5: memref<2xf32, #tpu.memory_space<smem>>, %arg6: memref<2x8x256xf32, #tpu.memory_space<vmem>>) attributes {dimension_semantics = [#tpu.dimension_semantics<parallel>], iteration_bounds = array<i64: 1>, scalar_prefetch = 0 : i64, scratch_operands = 0 : i64, tpu.core_type = #tpu.core_type<tc>, window_params = [{pipeline_mode = #tpu.pipeline_mode<synchronous>, transform_indices = @transform_0, window_bounds = array<i64: 72, 256>}, {transform_indices = @transform_1, window_bounds = array<i64: 2, 8, 256>}, {transform_indices = @transform_2, window_bounds = array<i64: 2, 4, 8, 72>}, {transform_indices = @transform_3, window_bounds = array<i64: 2, 4, 8, 1>}, {transform_indices = @transform_4, window_bounds = array<i64: 2>}, {transform_indices = @transform_5, window_bounds = array<i64: 2, 8, 256>}]} {
    %c0 = arith.constant 0 : index
    %c0_0 = arith.constant 0 : index
    %c0_1 = arith.constant 0 : index
    %0 = vector.load %arg2[%c0, %c0_0, %c0_1] : memref<2x8x256xf32, #tpu.memory_space<vmem>>, vector<1x8x256xf32>
    %1 = vector.shape_cast %0 : vector<1x8x256xf32> to vector<8x256xf32>
    %c17_i32 = arith.constant 17 : i32
    %2 = tpu.dynamic_rotate %1 by %c17_i32 dim 1 : vector<8x256xf32>, i32 -> vector<8x256xf32>
    %c16_i32 = arith.constant 16 : i32
    %3 = tpu.dynamic_rotate %1 by %c16_i32 dim 1 : vector<8x256xf32>, i32 -> vector<8x256xf32>
    %c15_i32 = arith.constant 15 : i32
    %4 = tpu.dynamic_rotate %1 by %c15_i32 dim 1 : vector<8x256xf32>, i32 -> vector<8x256xf32>
    %c1_i32 = arith.constant 1 : i32
    %5 = tpu.dynamic_rotate %1 by %c1_i32 dim 1 : vector<8x256xf32>, i32 -> vector<8x256xf32>
    %c255_i32 = arith.constant 255 : i32
    %6 = tpu.dynamic_rotate %1 by %c255_i32 dim 1 : vector<8x256xf32>, i32 -> vector<8x256xf32>
    %c241_i32 = arith.constant 241 : i32
    %7 = tpu.dynamic_rotate %1 by %c241_i32 dim 1 : vector<8x256xf32>, i32 -> vector<8x256xf32>
    %c240_i32 = arith.constant 240 : i32
    %8 = tpu.dynamic_rotate %1 by %c240_i32 dim 1 : vector<8x256xf32>, i32 -> vector<8x256xf32>
    %c239_i32 = arith.constant 239 : i32
    %9 = tpu.dynamic_rotate %1 by %c239_i32 dim 1 : vector<8x256xf32>, i32 -> vector<8x256xf32>
    %10 = tpu.concatenate %2, %3, %4, %5, %1, %6, %7, %8, %9 in 0 : vector<8x256xf32>, vector<8x256xf32>, vector<8x256xf32>, vector<8x256xf32>, vector<8x256xf32>, vector<8x256xf32>, vector<8x256xf32>, vector<8x256xf32>, vector<8x256xf32> -> vector<72x256xf32>
    %c0_2 = arith.constant 0 : index
    %c0_3 = arith.constant 0 : index
    %11 = vector.load %arg1[%c0_2, %c0_3] : memref<72x256xf32, #tpu.memory_space<vmem>>, vector<72x256xf32>
    %12 = arith.mulf %10, %11 : vector<72x256xf32>
    %c0_4 = arith.constant 0 : index
    %c0_5 = arith.constant 0 : index
    %c0_6 = arith.constant 0 : index
    %c0_7 = arith.constant 0 : index
    %13 = vector.load %arg3[%c0_4, %c0_5, %c0_6, %c0_7] : memref<2x4x8x72xf32, #tpu.memory_space<vmem>>, vector<1x1x8x72xf32>
    %14 = vector.shape_cast %13 : vector<1x1x8x72xf32> to vector<8x72xf32>
    %cst = arith.constant dense<0.000000e+00> : vector<8x256xf32>
    %15 = tpu.matmul %14, %12, %cst {dimension_numbers = #tpu.dot_dimension_numbers<[1], [0], [0], [1], [0, 0, 1, 1], [], []>} : vector<8x72xf32>, vector<72x256xf32>, vector<8x256xf32> -> vector<8x256xf32>
    %c0_8 = arith.constant 0 : index
    %c0_9 = arith.constant 0 : index
    %c0_10 = arith.constant 0 : index
    %c0_11 = arith.constant 0 : index
    %16 = vector.load %arg4[%c0_8, %c0_9, %c0_10, %c0_11] : memref<2x4x8x1xf32, #tpu.memory_space<vmem>>, vector<1x1x8x1xf32>
    %17 = vector.shape_cast %16 : vector<1x1x8x1xf32> to vector<8x1xf32>
    %18 = vector.broadcast %17 : vector<8x1xf32> to vector<8x256xf32>
    %19 = arith.addf %15, %18 : vector<8x256xf32>
    %cst_12 = arith.constant 0.00999999977 : f32
    %20 = vector.broadcast %cst_12 : f32 to vector<8x256xf32>
    %21 = arith.mulf %20, %19 : vector<8x256xf32>
    %22 = arith.maximumf %19, %21 : vector<8x256xf32>
    %c17_i32_13 = arith.constant 17 : i32
    %23 = tpu.dynamic_rotate %22 by %c17_i32_13 dim 1 : vector<8x256xf32>, i32 -> vector<8x256xf32>
    %c16_i32_14 = arith.constant 16 : i32
    %24 = tpu.dynamic_rotate %22 by %c16_i32_14 dim 1 : vector<8x256xf32>, i32 -> vector<8x256xf32>
    %c15_i32_15 = arith.constant 15 : i32
    %25 = tpu.dynamic_rotate %22 by %c15_i32_15 dim 1 : vector<8x256xf32>, i32 -> vector<8x256xf32>
    %c1_i32_16 = arith.constant 1 : i32
    %26 = tpu.dynamic_rotate %22 by %c1_i32_16 dim 1 : vector<8x256xf32>, i32 -> vector<8x256xf32>
    %c255_i32_17 = arith.constant 255 : i32
    %27 = tpu.dynamic_rotate %22 by %c255_i32_17 dim 1 : vector<8x256xf32>, i32 -> vector<8x256xf32>
    %c241_i32_18 = arith.constant 241 : i32
    %28 = tpu.dynamic_rotate %22 by %c241_i32_18 dim 1 : vector<8x256xf32>, i32 -> vector<8x256xf32>
    %c240_i32_19 = arith.constant 240 : i32
    %29 = tpu.dynamic_rotate %22 by %c240_i32_19 dim 1 : vector<8x256xf32>, i32 -> vector<8x256xf32>
    %c239_i32_20 = arith.constant 239 : i32
    %30 = tpu.dynamic_rotate %22 by %c239_i32_20 dim 1 : vector<8x256xf32>, i32 -> vector<8x256xf32>
    %31 = tpu.concatenate %23, %24, %25, %26, %22, %27, %28, %29, %30 in 0 : vector<8x256xf32>, vector<8x256xf32>, vector<8x256xf32>, vector<8x256xf32>, vector<8x256xf32>, vector<8x256xf32>, vector<8x256xf32>, vector<8x256xf32>, vector<8x256xf32> -> vector<72x256xf32>
    %c0_21 = arith.constant 0 : index
    %c0_22 = arith.constant 0 : index
    %32 = vector.load %arg1[%c0_21, %c0_22] : memref<72x256xf32, #tpu.memory_space<vmem>>, vector<72x256xf32>
    %33 = arith.mulf %31, %32 : vector<72x256xf32>
    %c0_23 = arith.constant 0 : index
    %c1 = arith.constant 1 : index
    %c0_24 = arith.constant 0 : index
    %c0_25 = arith.constant 0 : index
    %34 = vector.load %arg3[%c0_23, %c1, %c0_24, %c0_25] : memref<2x4x8x72xf32, #tpu.memory_space<vmem>>, vector<1x1x8x72xf32>
    %35 = vector.shape_cast %34 : vector<1x1x8x72xf32> to vector<8x72xf32>
    %cst_26 = arith.constant dense<0.000000e+00> : vector<8x256xf32>
    %36 = tpu.matmul %35, %33, %cst_26 {dimension_numbers = #tpu.dot_dimension_numbers<[1], [0], [0], [1], [0, 0, 1, 1], [], []>} : vector<8x72xf32>, vector<72x256xf32>, vector<8x256xf32> -> vector<8x256xf32>
    %c0_27 = arith.constant 0 : index
    %c1_28 = arith.constant 1 : index
    %c0_29 = arith.constant 0 : index
    %c0_30 = arith.constant 0 : index
    %37 = vector.load %arg4[%c0_27, %c1_28, %c0_29, %c0_30] : memref<2x4x8x1xf32, #tpu.memory_space<vmem>>, vector<1x1x8x1xf32>
    %38 = vector.shape_cast %37 : vector<1x1x8x1xf32> to vector<8x1xf32>
    %39 = vector.broadcast %38 : vector<8x1xf32> to vector<8x256xf32>
    %40 = arith.addf %36, %39 : vector<8x256xf32>
    %cst_31 = arith.constant 0.00999999977 : f32
    %41 = vector.broadcast %cst_31 : f32 to vector<8x256xf32>
    %42 = arith.mulf %41, %40 : vector<8x256xf32>
    %43 = arith.maximumf %40, %42 : vector<8x256xf32>
    %c17_i32_32 = arith.constant 17 : i32
    %44 = tpu.dynamic_rotate %43 by %c17_i32_32 dim 1 : vector<8x256xf32>, i32 -> vector<8x256xf32>
    %c16_i32_33 = arith.constant 16 : i32
    %45 = tpu.dynamic_rotate %43 by %c16_i32_33 dim 1 : vector<8x256xf32>, i32 -> vector<8x256xf32>
    %c15_i32_34 = arith.constant 15 : i32
    %46 = tpu.dynamic_rotate %43 by %c15_i32_34 dim 1 : vector<8x256xf32>, i32 -> vector<8x256xf32>
    %c1_i32_35 = arith.constant 1 : i32
    %47 = tpu.dynamic_rotate %43 by %c1_i32_35 dim 1 : vector<8x256xf32>, i32 -> vector<8x256xf32>
    %c255_i32_36 = arith.constant 255 : i32
    %48 = tpu.dynamic_rotate %43 by %c255_i32_36 dim 1 : vector<8x256xf32>, i32 -> vector<8x256xf32>
    %c241_i32_37 = arith.constant 241 : i32
    %49 = tpu.dynamic_rotate %43 by %c241_i32_37 dim 1 : vector<8x256xf32>, i32 -> vector<8x256xf32>
    %c240_i32_38 = arith.constant 240 : i32
    %50 = tpu.dynamic_rotate %43 by %c240_i32_38 dim 1 : vector<8x256xf32>, i32 -> vector<8x256xf32>
    %c239_i32_39 = arith.constant 239 : i32
    %51 = tpu.dynamic_rotate %43 by %c239_i32_39 dim 1 : vector<8x256xf32>, i32 -> vector<8x256xf32>
    %52 = tpu.concatenate %44, %45, %46, %47, %43, %48, %49, %50, %51 in 0 : vector<8x256xf32>, vector<8x256xf32>, vector<8x256xf32>, vector<8x256xf32>, vector<8x256xf32>, vector<8x256xf32>, vector<8x256xf32>, vector<8x256xf32>, vector<8x256xf32> -> vector<72x256xf32>
    %c0_40 = arith.constant 0 : index
    %c0_41 = arith.constant 0 : index
    %53 = vector.load %arg1[%c0_40, %c0_41] : memref<72x256xf32, #tpu.memory_space<vmem>>, vector<72x256xf32>
    %54 = arith.mulf %52, %53 : vector<72x256xf32>
    %c0_42 = arith.constant 0 : index
    %c2 = arith.constant 2 : index
    %c0_43 = arith.constant 0 : index
    %c0_44 = arith.constant 0 : index
    %55 = vector.load %arg3[%c0_42, %c2, %c0_43, %c0_44] : memref<2x4x8x72xf32, #tpu.memory_space<vmem>>, vector<1x1x8x72xf32>
    %56 = vector.shape_cast %55 : vector<1x1x8x72xf32> to vector<8x72xf32>
    %cst_45 = arith.constant dense<0.000000e+00> : vector<8x256xf32>
    %57 = tpu.matmul %56, %54, %cst_45 {dimension_numbers = #tpu.dot_dimension_numbers<[1], [0], [0], [1], [0, 0, 1, 1], [], []>} : vector<8x72xf32>, vector<72x256xf32>, vector<8x256xf32> -> vector<8x256xf32>
    %c0_46 = arith.constant 0 : index
    %c2_47 = arith.constant 2 : index
    %c0_48 = arith.constant 0 : index
    %c0_49 = arith.constant 0 : index
    %58 = vector.load %arg4[%c0_46, %c2_47, %c0_48, %c0_49] : memref<2x4x8x1xf32, #tpu.memory_space<vmem>>, vector<1x1x8x1xf32>
    %59 = vector.shape_cast %58 : vector<1x1x8x1xf32> to vector<8x1xf32>
    %60 = vector.broadcast %59 : vector<8x1xf32> to vector<8x256xf32>
    %61 = arith.addf %57, %60 : vector<8x256xf32>
    %cst_50 = arith.constant 0.00999999977 : f32
    %62 = vector.broadcast %cst_50 : f32 to vector<8x256xf32>
    %63 = arith.mulf %62, %61 : vector<8x256xf32>
    %64 = arith.maximumf %61, %63 : vector<8x256xf32>
    %c17_i32_51 = arith.constant 17 : i32
    %65 = tpu.dynamic_rotate %64 by %c17_i32_51 dim 1 : vector<8x256xf32>, i32 -> vector<8x256xf32>
    %c16_i32_52 = arith.constant 16 : i32
    %66 = tpu.dynamic_rotate %64 by %c16_i32_52 dim 1 : vector<8x256xf32>, i32 -> vector<8x256xf32>
    %c15_i32_53 = arith.constant 15 : i32
    %67 = tpu.dynamic_rotate %64 by %c15_i32_53 dim 1 : vector<8x256xf32>, i32 -> vector<8x256xf32>
    %c1_i32_54 = arith.constant 1 : i32
    %68 = tpu.dynamic_rotate %64 by %c1_i32_54 dim 1 : vector<8x256xf32>, i32 -> vector<8x256xf32>
    %c255_i32_55 = arith.constant 255 : i32
    %69 = tpu.dynamic_rotate %64 by %c255_i32_55 dim 1 : vector<8x256xf32>, i32 -> vector<8x256xf32>
    %c241_i32_56 = arith.constant 241 : i32
    %70 = tpu.dynamic_rotate %64 by %c241_i32_56 dim 1 : vector<8x256xf32>, i32 -> vector<8x256xf32>
    %c240_i32_57 = arith.constant 240 : i32
    %71 = tpu.dynamic_rotate %64 by %c240_i32_57 dim 1 : vector<8x256xf32>, i32 -> vector<8x256xf32>
    %c239_i32_58 = arith.constant 239 : i32
    %72 = tpu.dynamic_rotate %64 by %c239_i32_58 dim 1 : vector<8x256xf32>, i32 -> vector<8x256xf32>
    %73 = tpu.concatenate %65, %66, %67, %68, %64, %69, %70, %71, %72 in 0 : vector<8x256xf32>, vector<8x256xf32>, vector<8x256xf32>, vector<8x256xf32>, vector<8x256xf32>, vector<8x256xf32>, vector<8x256xf32>, vector<8x256xf32>, vector<8x256xf32> -> vector<72x256xf32>
    %c0_59 = arith.constant 0 : index
    %c0_60 = arith.constant 0 : index
    %74 = vector.load %arg1[%c0_59, %c0_60] : memref<72x256xf32, #tpu.memory_space<vmem>>, vector<72x256xf32>
    %75 = arith.mulf %73, %74 : vector<72x256xf32>
    %c0_61 = arith.constant 0 : index
    %c3 = arith.constant 3 : index
    %c0_62 = arith.constant 0 : index
    %c0_63 = arith.constant 0 : index
    %76 = vector.load %arg3[%c0_61, %c3, %c0_62, %c0_63] : memref<2x4x8x72xf32, #tpu.memory_space<vmem>>, vector<1x1x8x72xf32>
    %77 = vector.shape_cast %76 : vector<1x1x8x72xf32> to vector<8x72xf32>
    %cst_64 = arith.constant dense<0.000000e+00> : vector<8x256xf32>
    %78 = tpu.matmul %77, %75, %cst_64 {dimension_numbers = #tpu.dot_dimension_numbers<[1], [0], [0], [1], [0, 0, 1, 1], [], []>} : vector<8x72xf32>, vector<72x256xf32>, vector<8x256xf32> -> vector<8x256xf32>
    %c0_65 = arith.constant 0 : index
    %c3_66 = arith.constant 3 : index
    %c0_67 = arith.constant 0 : index
    %c0_68 = arith.constant 0 : index
    %79 = vector.load %arg4[%c0_65, %c3_66, %c0_67, %c0_68] : memref<2x4x8x1xf32, #tpu.memory_space<vmem>>, vector<1x1x8x1xf32>
    %80 = vector.shape_cast %79 : vector<1x1x8x1xf32> to vector<8x1xf32>
    %81 = vector.broadcast %80 : vector<8x1xf32> to vector<8x256xf32>
    %82 = arith.addf %78, %81 : vector<8x256xf32>
    %c2_i32 = arith.constant 2 : i32
    %83 = arith.muli %arg0, %c2_i32 : i32
    %c0_i32 = arith.constant 0 : i32
    %84 = arith.addi %83, %c0_i32 : i32
    %85 = arith.index_cast %84 : i32 to index
    %86 = memref.load %arg5[%85] : memref<2xf32, #tpu.memory_space<smem>>
    %87 = vector.broadcast %86 : f32 to vector<8x256xf32>
    %88 = arith.mulf %87, %82 : vector<8x256xf32>
    %cst_69 = arith.constant 1.000000e+00 : f32
    %89 = arith.subf %cst_69, %86 : f32
    %90 = vector.broadcast %89 : f32 to vector<8x256xf32>
    %91 = arith.mulf %90, %1 : vector<8x256xf32>
    %92 = arith.addf %88, %91 : vector<8x256xf32>
    %93 = arith.mulf %1, %1 : vector<8x256xf32>
    %94 = vector.shape_cast %93 : vector<8x256xf32> to vector<1x8x256xf32>
    %cst_70 = arith.constant dense<0.000000e+00> : vector<1xf32>
    %95 = vector.multi_reduction <add>, %94, %cst_70 [1, 2] : vector<1x8x256xf32> to vector<1xf32>
    %96 = vector.shape_cast %95 : vector<1xf32> to vector<1x1x1xf32>
    %97 = vector.extract %96[0, 0, 0] : f32 from vector<1x1x1xf32>
    %98 = vector.broadcast %97 : f32 to vector<1x1xf32>
    %99 = arith.mulf %92, %92 : vector<8x256xf32>
    %100 = vector.shape_cast %99 : vector<8x256xf32> to vector<1x8x256xf32>
    %cst_71 = arith.constant dense<0.000000e+00> : vector<1xf32>
    %101 = vector.multi_reduction <add>, %100, %cst_71 [1, 2] : vector<1x8x256xf32> to vector<1xf32>
    %102 = vector.shape_cast %101 : vector<1xf32> to vector<1x1x1xf32>
    %103 = vector.extract %102[0, 0, 0] : f32 from vector<1x1x1xf32>
    %104 = vector.broadcast %103 : f32 to vector<1x1xf32>
    %105 = math.sqrt %98 : vector<1x1xf32>
    %cst_72 = arith.constant 9.99999974E-6 : f32
    %106 = vector.broadcast %cst_72 : f32 to vector<1x1xf32>
    %107 = arith.addf %104, %106 : vector<1x1xf32>
    %108 = math.rsqrt %107 : vector<1x1xf32>
    %109 = arith.mulf %105, %108 : vector<1x1xf32>
    %110 = vector.broadcast %109 : vector<1x1xf32> to vector<8x256xf32>
    %111 = arith.mulf %92, %110 : vector<8x256xf32>
    %c0_73 = arith.constant 0 : index
    %c0_74 = arith.constant 0 : index
    %c0_75 = arith.constant 0 : index
    %112 = vector.load %arg6[%c0_73, %c0_74, %c0_75] : memref<2x8x256xf32, #tpu.memory_space<vmem>>, vector<1x8x256xf32>
    %113 = vector.shape_cast %112 : vector<1x8x256xf32> to vector<8x256xf32>
    %114 = vector.shape_cast %111 : vector<8x256xf32> to vector<1x8x256xf32>
    tpu.vector_store %arg6[%c0_73, %c0_74, %c0_75], %114 {strides = array<i32>} : memref<2x8x256xf32, #tpu.memory_space<vmem>>, vector<1x8x256xf32>,
    %c1_76 = arith.constant 1 : index
    %c0_77 = arith.constant 0 : index
    %c0_78 = arith.constant 0 : index
    %115 = vector.load %arg2[%c1_76, %c0_77, %c0_78] : memref<2x8x256xf32, #tpu.memory_space<vmem>>, vector<1x8x256xf32>
    %116 = vector.shape_cast %115 : vector<1x8x256xf32> to vector<8x256xf32>
    %c17_i32_79 = arith.constant 17 : i32
    %117 = tpu.dynamic_rotate %116 by %c17_i32_79 dim 1 : vector<8x256xf32>, i32 -> vector<8x256xf32>
    %c16_i32_80 = arith.constant 16 : i32
    %118 = tpu.dynamic_rotate %116 by %c16_i32_80 dim 1 : vector<8x256xf32>, i32 -> vector<8x256xf32>
    %c15_i32_81 = arith.constant 15 : i32
    %119 = tpu.dynamic_rotate %116 by %c15_i32_81 dim 1 : vector<8x256xf32>, i32 -> vector<8x256xf32>
    %c1_i32_82 = arith.constant 1 : i32
    %120 = tpu.dynamic_rotate %116 by %c1_i32_82 dim 1 : vector<8x256xf32>, i32 -> vector<8x256xf32>
    %c255_i32_83 = arith.constant 255 : i32
    %121 = tpu.dynamic_rotate %116 by %c255_i32_83 dim 1 : vector<8x256xf32>, i32 -> vector<8x256xf32>
    %c241_i32_84 = arith.constant 241 : i32
    %122 = tpu.dynamic_rotate %116 by %c241_i32_84 dim 1 : vector<8x256xf32>, i32 -> vector<8x256xf32>
    %c240_i32_85 = arith.constant 240 : i32
    %123 = tpu.dynamic_rotate %116 by %c240_i32_85 dim 1 : vector<8x256xf32>, i32 -> vector<8x256xf32>
    %c239_i32_86 = arith.constant 239 : i32
    %124 = tpu.dynamic_rotate %116 by %c239_i32_86 dim 1 : vector<8x256xf32>, i32 -> vector<8x256xf32>
    %125 = tpu.concatenate %117, %118, %119, %120, %116, %121, %122, %123, %124 in 0 : vector<8x256xf32>, vector<8x256xf32>, vector<8x256xf32>, vector<8x256xf32>, vector<8x256xf32>, vector<8x256xf32>, vector<8x256xf32>, vector<8x256xf32>, vector<8x256xf32> -> vector<72x256xf32>
    %c0_87 = arith.constant 0 : index
    %c0_88 = arith.constant 0 : index
    %126 = vector.load %arg1[%c0_87, %c0_88] : memref<72x256xf32, #tpu.memory_space<vmem>>, vector<72x256xf32>
    %127 = arith.mulf %125, %126 : vector<72x256xf32>
    %c1_89 = arith.constant 1 : index
    %c0_90 = arith.constant 0 : index
    %c0_91 = arith.constant 0 : index
    %c0_92 = arith.constant 0 : index
    %128 = vector.load %arg3[%c1_89, %c0_90, %c0_91, %c0_92] : memref<2x4x8x72xf32, #tpu.memory_space<vmem>>, vector<1x1x8x72xf32>
    %129 = vector.shape_cast %128 : vector<1x1x8x72xf32> to vector<8x72xf32>
    %cst_93 = arith.constant dense<0.000000e+00> : vector<8x256xf32>
    %130 = tpu.matmul %129, %127, %cst_93 {dimension_numbers = #tpu.dot_dimension_numbers<[1], [0], [0], [1], [0, 0, 1, 1], [], []>} : vector<8x72xf32>, vector<72x256xf32>, vector<8x256xf32> -> vector<8x256xf32>
    %c1_94 = arith.constant 1 : index
    %c0_95 = arith.constant 0 : index
    %c0_96 = arith.constant 0 : index
    %c0_97 = arith.constant 0 : index
    %131 = vector.load %arg4[%c1_94, %c0_95, %c0_96, %c0_97] : memref<2x4x8x1xf32, #tpu.memory_space<vmem>>, vector<1x1x8x1xf32>
    %132 = vector.shape_cast %131 : vector<1x1x8x1xf32> to vector<8x1xf32>
    %133 = vector.broadcast %132 : vector<8x1xf32> to vector<8x256xf32>
    %134 = arith.addf %130, %133 : vector<8x256xf32>
    %cst_98 = arith.constant 0.00999999977 : f32
    %135 = vector.broadcast %cst_98 : f32 to vector<8x256xf32>
    %136 = arith.mulf %135, %134 : vector<8x256xf32>
    %137 = arith.maximumf %134, %136 : vector<8x256xf32>
    %c17_i32_99 = arith.constant 17 : i32
    %138 = tpu.dynamic_rotate %137 by %c17_i32_99 dim 1 : vector<8x256xf32>, i32 -> vector<8x256xf32>
    %c16_i32_100 = arith.constant 16 : i32
    %139 = tpu.dynamic_rotate %137 by %c16_i32_100 dim 1 : vector<8x256xf32>, i32 -> vector<8x256xf32>
    %c15_i32_101 = arith.constant 15 : i32
    %140 = tpu.dynamic_rotate %137 by %c15_i32_101 dim 1 : vector<8x256xf32>, i32 -> vector<8x256xf32>
    %c1_i32_102 = arith.constant 1 : i32
    %141 = tpu.dynamic_rotate %137 by %c1_i32_102 dim 1 : vector<8x256xf32>, i32 -> vector<8x256xf32>
    %c255_i32_103 = arith.constant 255 : i32
    %142 = tpu.dynamic_rotate %137 by %c255_i32_103 dim 1 : vector<8x256xf32>, i32 -> vector<8x256xf32>
    %c241_i32_104 = arith.constant 241 : i32
    %143 = tpu.dynamic_rotate %137 by %c241_i32_104 dim 1 : vector<8x256xf32>, i32 -> vector<8x256xf32>
    %c240_i32_105 = arith.constant 240 : i32
    %144 = tpu.dynamic_rotate %137 by %c240_i32_105 dim 1 : vector<8x256xf32>, i32 -> vector<8x256xf32>
    %c239_i32_106 = arith.constant 239 : i32
    %145 = tpu.dynamic_rotate %137 by %c239_i32_106 dim 1 : vector<8x256xf32>, i32 -> vector<8x256xf32>
    %146 = tpu.concatenate %138, %139, %140, %141, %137, %142, %143, %144, %145 in 0 : vector<8x256xf32>, vector<8x256xf32>, vector<8x256xf32>, vector<8x256xf32>, vector<8x256xf32>, vector<8x256xf32>, vector<8x256xf32>, vector<8x256xf32>, vector<8x256xf32> -> vector<72x256xf32>
    %c0_107 = arith.constant 0 : index
    %c0_108 = arith.constant 0 : index
    %147 = vector.load %arg1[%c0_107, %c0_108] : memref<72x256xf32, #tpu.memory_space<vmem>>, vector<72x256xf32>
    %148 = arith.mulf %146, %147 : vector<72x256xf32>
    %c1_109 = arith.constant 1 : index
    %c1_110 = arith.constant 1 : index
    %c0_111 = arith.constant 0 : index
    %c0_112 = arith.constant 0 : index
    %149 = vector.load %arg3[%c1_109, %c1_110, %c0_111, %c0_112] : memref<2x4x8x72xf32, #tpu.memory_space<vmem>>, vector<1x1x8x72xf32>
    %150 = vector.shape_cast %149 : vector<1x1x8x72xf32> to vector<8x72xf32>
    %cst_113 = arith.constant dense<0.000000e+00> : vector<8x256xf32>
    %151 = tpu.matmul %150, %148, %cst_113 {dimension_numbers = #tpu.dot_dimension_numbers<[1], [0], [0], [1], [0, 0, 1, 1], [], []>} : vector<8x72xf32>, vector<72x256xf32>, vector<8x256xf32> -> vector<8x256xf32>
    %c1_114 = arith.constant 1 : index
    %c1_115 = arith.constant 1 : index
    %c0_116 = arith.constant 0 : index
    %c0_117 = arith.constant 0 : index
    %152 = vector.load %arg4[%c1_114, %c1_115, %c0_116, %c0_117] : memref<2x4x8x1xf32, #tpu.memory_space<vmem>>, vector<1x1x8x1xf32>
    %153 = vector.shape_cast %152 : vector<1x1x8x1xf32> to vector<8x1xf32>
    %154 = vector.broadcast %153 : vector<8x1xf32> to vector<8x256xf32>
    %155 = arith.addf %151, %154 : vector<8x256xf32>
    %cst_118 = arith.constant 0.00999999977 : f32
    %156 = vector.broadcast %cst_118 : f32 to vector<8x256xf32>
    %157 = arith.mulf %156, %155 : vector<8x256xf32>
    %158 = arith.maximumf %155, %157 : vector<8x256xf32>
    %c17_i32_119 = arith.constant 17 : i32
    %159 = tpu.dynamic_rotate %158 by %c17_i32_119 dim 1 : vector<8x256xf32>, i32 -> vector<8x256xf32>
    %c16_i32_120 = arith.constant 16 : i32
    %160 = tpu.dynamic_rotate %158 by %c16_i32_120 dim 1 : vector<8x256xf32>, i32 -> vector<8x256xf32>
    %c15_i32_121 = arith.constant 15 : i32
    %161 = tpu.dynamic_rotate %158 by %c15_i32_121 dim 1 : vector<8x256xf32>, i32 -> vector<8x256xf32>
    %c1_i32_122 = arith.constant 1 : i32
    %162 = tpu.dynamic_rotate %158 by %c1_i32_122 dim 1 : vector<8x256xf32>, i32 -> vector<8x256xf32>
    %c255_i32_123 = arith.constant 255 : i32
    %163 = tpu.dynamic_rotate %158 by %c255_i32_123 dim 1 : vector<8x256xf32>, i32 -> vector<8x256xf32>
    %c241_i32_124 = arith.constant 241 : i32
    %164 = tpu.dynamic_rotate %158 by %c241_i32_124 dim 1 : vector<8x256xf32>, i32 -> vector<8x256xf32>
    %c240_i32_125 = arith.constant 240 : i32
    %165 = tpu.dynamic_rotate %158 by %c240_i32_125 dim 1 : vector<8x256xf32>, i32 -> vector<8x256xf32>
    %c239_i32_126 = arith.constant 239 : i32
    %166 = tpu.dynamic_rotate %158 by %c239_i32_126 dim 1 : vector<8x256xf32>, i32 -> vector<8x256xf32>
    %167 = tpu.concatenate %159, %160, %161, %162, %158, %163, %164, %165, %166 in 0 : vector<8x256xf32>, vector<8x256xf32>, vector<8x256xf32>, vector<8x256xf32>, vector<8x256xf32>, vector<8x256xf32>, vector<8x256xf32>, vector<8x256xf32>, vector<8x256xf32> -> vector<72x256xf32>
    %c0_127 = arith.constant 0 : index
    %c0_128 = arith.constant 0 : index
    %168 = vector.load %arg1[%c0_127, %c0_128] : memref<72x256xf32, #tpu.memory_space<vmem>>, vector<72x256xf32>
    %169 = arith.mulf %167, %168 : vector<72x256xf32>
    %c1_129 = arith.constant 1 : index
    %c2_130 = arith.constant 2 : index
    %c0_131 = arith.constant 0 : index
    %c0_132 = arith.constant 0 : index
    %170 = vector.load %arg3[%c1_129, %c2_130, %c0_131, %c0_132] : memref<2x4x8x72xf32, #tpu.memory_space<vmem>>, vector<1x1x8x72xf32>
    %171 = vector.shape_cast %170 : vector<1x1x8x72xf32> to vector<8x72xf32>
    %cst_133 = arith.constant dense<0.000000e+00> : vector<8x256xf32>
    %172 = tpu.matmul %171, %169, %cst_133 {dimension_numbers = #tpu.dot_dimension_numbers<[1], [0], [0], [1], [0, 0, 1, 1], [], []>} : vector<8x72xf32>, vector<72x256xf32>, vector<8x256xf32> -> vector<8x256xf32>
    %c1_134 = arith.constant 1 : index
    %c2_135 = arith.constant 2 : index
    %c0_136 = arith.constant 0 : index
    %c0_137 = arith.constant 0 : index
    %173 = vector.load %arg4[%c1_134, %c2_135, %c0_136, %c0_137] : memref<2x4x8x1xf32, #tpu.memory_space<vmem>>, vector<1x1x8x1xf32>
    %174 = vector.shape_cast %173 : vector<1x1x8x1xf32> to vector<8x1xf32>
    %175 = vector.broadcast %174 : vector<8x1xf32> to vector<8x256xf32>
    %176 = arith.addf %172, %175 : vector<8x256xf32>
    %cst_138 = arith.constant 0.00999999977 : f32
    %177 = vector.broadcast %cst_138 : f32 to vector<8x256xf32>
    %178 = arith.mulf %177, %176 : vector<8x256xf32>
    %179 = arith.maximumf %176, %178 : vector<8x256xf32>
    %c17_i32_139 = arith.constant 17 : i32
    %180 = tpu.dynamic_rotate %179 by %c17_i32_139 dim 1 : vector<8x256xf32>, i32 -> vector<8x256xf32>
    %c16_i32_140 = arith.constant 16 : i32
    %181 = tpu.dynamic_rotate %179 by %c16_i32_140 dim 1 : vector<8x256xf32>, i32 -> vector<8x256xf32>
    %c15_i32_141 = arith.constant 15 : i32
    %182 = tpu.dynamic_rotate %179 by %c15_i32_141 dim 1 : vector<8x256xf32>, i32 -> vector<8x256xf32>
    %c1_i32_142 = arith.constant 1 : i32
    %183 = tpu.dynamic_rotate %179 by %c1_i32_142 dim 1 : vector<8x256xf32>, i32 -> vector<8x256xf32>
    %c255_i32_143 = arith.constant 255 : i32
    %184 = tpu.dynamic_rotate %179 by %c255_i32_143 dim 1 : vector<8x256xf32>, i32 -> vector<8x256xf32>
    %c241_i32_144 = arith.constant 241 : i32
    %185 = tpu.dynamic_rotate %179 by %c241_i32_144 dim 1 : vector<8x256xf32>, i32 -> vector<8x256xf32>
    %c240_i32_145 = arith.constant 240 : i32
    %186 = tpu.dynamic_rotate %179 by %c240_i32_145 dim 1 : vector<8x256xf32>, i32 -> vector<8x256xf32>
    %c239_i32_146 = arith.constant 239 : i32
    %187 = tpu.dynamic_rotate %179 by %c239_i32_146 dim 1 : vector<8x256xf32>, i32 -> vector<8x256xf32>
    %188 = tpu.concatenate %180, %181, %182, %183, %179, %184, %185, %186, %187 in 0 : vector<8x256xf32>, vector<8x256xf32>, vector<8x256xf32>, vector<8x256xf32>, vector<8x256xf32>, vector<8x256xf32>, vector<8x256xf32>, vector<8x256xf32>, vector<8x256xf32> -> vector<72x256xf32>
    %c0_147 = arith.constant 0 : index
    %c0_148 = arith.constant 0 : index
    %189 = vector.load %arg1[%c0_147, %c0_148] : memref<72x256xf32, #tpu.memory_space<vmem>>, vector<72x256xf32>
    %190 = arith.mulf %188, %189 : vector<72x256xf32>
    %c1_149 = arith.constant 1 : index
    %c3_150 = arith.constant 3 : index
    %c0_151 = arith.constant 0 : index
    %c0_152 = arith.constant 0 : index
    %191 = vector.load %arg3[%c1_149, %c3_150, %c0_151, %c0_152] : memref<2x4x8x72xf32, #tpu.memory_space<vmem>>, vector<1x1x8x72xf32>
    %192 = vector.shape_cast %191 : vector<1x1x8x72xf32> to vector<8x72xf32>
    %cst_153 = arith.constant dense<0.000000e+00> : vector<8x256xf32>
    %193 = tpu.matmul %192, %190, %cst_153 {dimension_numbers = #tpu.dot_dimension_numbers<[1], [0], [0], [1], [0, 0, 1, 1], [], []>} : vector<8x72xf32>, vector<72x256xf32>, vector<8x256xf32> -> vector<8x256xf32>
    %c1_154 = arith.constant 1 : index
    %c3_155 = arith.constant 3 : index
    %c0_156 = arith.constant 0 : index
    %c0_157 = arith.constant 0 : index
    %194 = vector.load %arg4[%c1_154, %c3_155, %c0_156, %c0_157] : memref<2x4x8x1xf32, #tpu.memory_space<vmem>>, vector<1x1x8x1xf32>
    %195 = vector.shape_cast %194 : vector<1x1x8x1xf32> to vector<8x1xf32>
    %196 = vector.broadcast %195 : vector<8x1xf32> to vector<8x256xf32>
    %197 = arith.addf %193, %196 : vector<8x256xf32>
    %c2_i32_158 = arith.constant 2 : i32
    %198 = arith.muli %arg0, %c2_i32_158 : i32
    %c1_i32_159 = arith.constant 1 : i32
    %199 = arith.addi %198, %c1_i32_159 : i32
    %200 = arith.index_cast %199 : i32 to index
    %201 = memref.load %arg5[%200] : memref<2xf32, #tpu.memory_space<smem>>
    %202 = vector.broadcast %201 : f32 to vector<8x256xf32>
    %203 = arith.mulf %202, %197 : vector<8x256xf32>
    %cst_160 = arith.constant 1.000000e+00 : f32
    %204 = arith.subf %cst_160, %201 : f32
    %205 = vector.broadcast %204 : f32 to vector<8x256xf32>
    %206 = arith.mulf %205, %116 : vector<8x256xf32>
    %207 = arith.addf %203, %206 : vector<8x256xf32>
    %208 = arith.mulf %116, %116 : vector<8x256xf32>
    %209 = vector.shape_cast %208 : vector<8x256xf32> to vector<1x8x256xf32>
    %cst_161 = arith.constant dense<0.000000e+00> : vector<1xf32>
    %210 = vector.multi_reduction <add>, %209, %cst_161 [1, 2] : vector<1x8x256xf32> to vector<1xf32>
    %211 = vector.shape_cast %210 : vector<1xf32> to vector<1x1x1xf32>
    %212 = vector.extract %211[0, 0, 0] : f32 from vector<1x1x1xf32>
    %213 = vector.broadcast %212 : f32 to vector<1x1xf32>
    %214 = arith.mulf %207, %207 : vector<8x256xf32>
    %215 = vector.shape_cast %214 : vector<8x256xf32> to vector<1x8x256xf32>
    %cst_162 = arith.constant dense<0.000000e+00> : vector<1xf32>
    %216 = vector.multi_reduction <add>, %215, %cst_162 [1, 2] : vector<1x8x256xf32> to vector<1xf32>
    %217 = vector.shape_cast %216 : vector<1xf32> to vector<1x1x1xf32>
    %218 = vector.extract %217[0, 0, 0] : f32 from vector<1x1x1xf32>
    %219 = vector.broadcast %218 : f32 to vector<1x1xf32>
    %220 = math.sqrt %213 : vector<1x1xf32>
    %cst_163 = arith.constant 9.99999974E-6 : f32
    %221 = vector.broadcast %cst_163 : f32 to vector<1x1xf32>
    %222 = arith.addf %219, %221 : vector<1x1xf32>
    %223 = math.rsqrt %222 : vector<1x1xf32>
    %224 = arith.mulf %220, %223 : vector<1x1xf32>
    %225 = vector.broadcast %224 : vector<1x1xf32> to vector<8x256xf32>
    %226 = arith.mulf %207, %225 : vector<8x256xf32>
    %c1_164 = arith.constant 1 : index
    %c0_165 = arith.constant 0 : index
    %c0_166 = arith.constant 0 : index
    %227 = vector.load %arg6[%c1_164, %c0_165, %c0_166] : memref<2x8x256xf32, #tpu.memory_space<vmem>>, vector<1x8x256xf32>
    %228 = vector.shape_cast %227 : vector<1x8x256xf32> to vector<8x256xf32>
    %229 = vector.shape_cast %226 : vector<8x256xf32> to vector<1x8x256xf32>
    tpu.vector_store %arg6[%c1_164, %c0_165, %c0_166], %229 {strides = array<i32>} : memref<2x8x256xf32, #tpu.memory_space<vmem>>, vector<1x8x256xf32>,
    return
  }
  func.func @transform_0(%arg0: i32) -> (i32, i32) {
    %c0_i32 = arith.constant 0 : i32
    %c0_i32_0 = arith.constant 0 : i32
    %c0_i32_1 = arith.constant 0 : i32
    return %c0_i32, %c0_i32_0 : i32, i32
  }
  func.func @transform_1(%arg0: i32) -> (i32, i32, i32) {
    %c0_i32 = arith.constant 0 : i32
    %c0_i32_0 = arith.constant 0 : i32
    %c0_i32_1 = arith.constant 0 : i32
    return %arg0, %c0_i32, %c0_i32_0 : i32, i32, i32
  }
  func.func @transform_2(%arg0: i32) -> (i32, i32, i32, i32) {
    %c0_i32 = arith.constant 0 : i32
    %c0_i32_0 = arith.constant 0 : i32
    %c0_i32_1 = arith.constant 0 : i32
    %c0_i32_2 = arith.constant 0 : i32
    return %arg0, %c0_i32, %c0_i32_0, %c0_i32_1 : i32, i32, i32, i32
  }
  func.func @transform_3(%arg0: i32) -> (i32, i32, i32, i32) {
    %c0_i32 = arith.constant 0 : i32
    %c0_i32_0 = arith.constant 0 : i32
    %c0_i32_1 = arith.constant 0 : i32
    %c0_i32_2 = arith.constant 0 : i32
    return %arg0, %c0_i32, %c0_i32_0, %c0_i32_1 : i32, i32, i32, i32
  }
  func.func @transform_4(%arg0: i32) -> i32 {
    %c0_i32 = arith.constant 0 : i32
    %c0_i32_0 = arith.constant 0 : i32
    return %c0_i32 : i32
  }
  func.func @transform_5(%arg0: i32) -> (i32, i32, i32) {
    %c0_i32 = arith.constant 0 : i32
    %c0_i32_0 = arith.constant 0 : i32
    %c0_i32_1 = arith.constant 0 : i32
    return %arg0, %c0_i32, %c0_i32_0 : i32, i32, i32
  }
}

</mosaic_0001>

<llo_original>
// kernel: tpu_custom_call.1
$region0: #{tpu_custom_call.1}
  #allocation0 [shape = 'u32[]', space=smem, size = 0x4, offset = 0x4, fixed_abs, tag = 'smem constant byte address 0x4 - core index']
  #allocation1 [shape = 'u32[144,128]{1,0:T(1,128)}', space=vmem, size = 0x12000, scoped, tag = 'internal scratch']
  %s0 = inlined_call_operand.hbm [shape: f32[72,256], index: 0, kind: input, shape index: {}]
  %s1 = inlined_call_operand.hbm [shape: f32[2,8,256], index: 1, kind: input, shape index: {}]
  %s2 = inlined_call_operand.vmem [shape: f32[2,4,8,72], index: 2, kind: input, shape index: {}]
  %s3 = inlined_call_operand.vmem [shape: f32[2,4,8,1], index: 3, kind: input, shape index: {}]
  %s4 = inlined_call_operand.vmem [shape: f32[2], index: 4, kind: input, shape index: {}]
  %s5 = inlined_call_operand.hbm [shape: f32[2,8,256], index: 5, kind: output, shape index: {}]
  %s6 = sld [smem:[#allocation0]]
  $region42: #{tpu_custom_call.1} parent=0
    _
  %s8 = ssub.s32 1, %s6
  %s9 = scalar_select 0, %s8, %s6
  $region1: #{tpu_custom_call.1} parent=0
    #allocation2 [shape = 'u8[73728]{0}', space=vmem, size = 0x12000, scoped, tag = 'input window, operand 0, single buffered']
    #allocation3 [shape = 's32[1]{0}', space=sflag, size = 0x4, scoped, tag = 'scoped memory for tpu_custom_call.1']
    #allocation4 [shape = 's32[1]{0}', space=sflag, size = 0x4, scoped, tag = 'scoped memory for tpu_custom_call.1']
    #allocation5 [shape = 's32[1]{0}', space=sflag, size = 0x4, scoped, tag = 'scoped memory for tpu_custom_call.1']
    #allocation6 [shape = 'u8[16384]{0}', space=vmem, size = 0x4000, scoped, tag = 'input window, operand 1, single buffered']
    #allocation7 [shape = 's32[1]{0}', space=sflag, size = 0x4, scoped, tag = 'scoped memory for tpu_custom_call.1']
    #allocation8 [shape = 'u8[512]{0}', space=smem, size = 0x200, scoped, tag = 'input window, operand 4, single buffered']
    #allocation9 [shape = 'u8[16384]{0}', space=vmem, size = 0x4000, scoped, tag = 'output window, operand 0, single buffered']
    %10 = vsyncpa [#allocation3], 0
    %11 = vsyncpa [#allocation7], 0
    %12 = vsyncpa [#allocation5], 0
    %13 = vsyncpa [#allocation4], 0
    // Predicated region
    $region2: #{tpu_custom_call.1} parent=1 // pred_check
      _
    $region3: #{tpu_custom_call.1} parent=1 // pred_check_branch
      %15 = sbr.rel (0) target = $region5
    $region4: #{tpu_custom_call.1} parent=1 // pred_region
      %s17 = ssub.s32 2304, 2304
      %18 = vsyncadd [#allocation3], %s17
      %s19 = sshll.u32 [#allocation2], 4
      %s20 = int_to_ptr.vmem [resolvable:$true] %s19
      %25 = dma.hbm_to_vmem [thread:$0]  %s0, 2304, %s20, [#allocation3], 256, 256, 16
    $region5: #{tpu_custom_call.1} parent=1 // pred_fallthru
      _
    // Predicated region
    $region6: #{tpu_custom_call.1} parent=1 // pred_check
      _
    $region7: #{tpu_custom_call.1} parent=1 // pred_check_branch
      %27 = sbr.rel (0) target = $region9
    $region8: #{tpu_custom_call.1} parent=1 // pred_region
      %s29 = ssub.s32 512, 512
      %30 = vsyncadd [#allocation7], %s29
      %s31 = sshll.u32 [#allocation6], 4
      %s32 = int_to_ptr.vmem [resolvable:$true] %s31
      %37 = dma.hbm_to_vmem [thread:$0]  %s1, 512, %s32, [#allocation7], 256, 256, 16
    $region9: #{tpu_custom_call.1} parent=1 // pred_fallthru
      _
    // Predicated region
    $region10: #{tpu_custom_call.1} parent=1 // pred_check
      _
    $region11: #{tpu_custom_call.1} parent=1 // pred_check_branch
      %39 = sbr.rel (0) target = $region13
    $region12: #{tpu_custom_call.1} parent=1 // pred_region
      _
    $region13: #{tpu_custom_call.1} parent=1 // pred_fallthru
      _
    // Predicated region
    $region14: #{tpu_custom_call.1} parent=1 // pred_check
      _
    $region15: #{tpu_custom_call.1} parent=1 // pred_check_branch
      %41 = sbr.rel (0) target = $region17
    $region16: #{tpu_custom_call.1} parent=1 // pred_region
      _
    $region17: #{tpu_custom_call.1} parent=1 // pred_fallthru
      _
    // Predicated region
    $region18: #{tpu_custom_call.1} parent=1 // pred_check
      _
    $region19: #{tpu_custom_call.1} parent=1 // pred_check_branch
      %43 = sbr.rel (0) target = $region21
    $region20: #{tpu_custom_call.1} parent=1 // pred_region
      %s45 = ssub.s32 16, 16
      %46 = vsyncadd [#allocation5], %s45
      %s48 = sshll.u32 %s4, 4
      %s49 = int_to_ptr.vmem [resolvable:$true] %s48
      %51 = dma.vmem_to_smem %s49, 16, [#allocation8], [#allocation5]
    $region21: #{tpu_custom_call.1} parent=1 // pred_fallthru
      _
    // Predicated region
    $region22: #{tpu_custom_call.1} parent=1 // pred_check
      _
    $region23: #{tpu_custom_call.1} parent=1 // pred_check_branch
      %53 = sbr.rel (0) target = $region25
    $region24: #{tpu_custom_call.1} parent=1 // pred_region
      %54 = dma.done [#allocation3], 2304
    $region25: #{tpu_custom_call.1} parent=1 // pred_fallthru
      _
    // Predicated region
    $region26: #{tpu_custom_call.1} parent=1 // pred_check
      _
    $region27: #{tpu_custom_call.1} parent=1 // pred_check_branch
      %56 = sbr.rel (0) target = $region29
    $region28: #{tpu_custom_call.1} parent=1 // pred_region
      %57 = dma.done [#allocation7], 512
    $region29: #{tpu_custom_call.1} parent=1 // pred_fallthru
      _
    // Predicated region
    $region30: #{tpu_custom_call.1} parent=1 // pred_check
      _
    $region31: #{tpu_custom_call.1} parent=1 // pred_check_branch
      %59 = sbr.rel (0) target = $region33
    $region32: #{tpu_custom_call.1} parent=1 // pred_region
      %60 = dma.done [#allocation5], 16
    $region33: #{tpu_custom_call.1} parent=1 // pred_fallthru
      _
    %61 = sfence
    %v62 = vld [vmem:[#allocation6] sm:$0xff]
    %v63 = vld [vmem:[#allocation6 + $0x8] sm:$0xff]
    %64 = vrot.lane.b32.xlu0 %v62, 17
    %v65 = vpop.permute.xlu0 %64
    %66 = vrot.lane.b32.xlu0 %v63, 17
    %v67 = vpop.permute.xlu0 %66
    %v68 = vlaneseq
    %v69 = vand.u32 %v68, 127
    %vm70 = vcmp.lt.s32.totalorder %v69, 17
    %v71 = vsel %vm70, %v65, %v67
    %v72 = vsel %vm70, %v67, %v65
    %73 = vrot.lane.b32.xlu0 %v62, 16
    %v74 = vpop.permute.xlu0 %73
    %75 = vrot.lane.b32.xlu0 %v63, 16
    %v76 = vpop.permute.xlu0 %75
    %vm77 = vcmp.lt.s32.totalorder %v69, 16
    %v78 = vsel %vm77, %v74, %v76
    %v79 = vsel %vm77, %v76, %v74
    %80 = vrot.lane.b32.xlu0 %v62, 15
    %v81 = vpop.permute.xlu0 %80
    %82 = vrot.lane.b32.xlu0 %v63, 15
    %v83 = vpop.permute.xlu0 %82
    %vm84 = vcmp.lt.s32.totalorder %v69, 15
    %v85 = vsel %vm84, %v81, %v83
    %v86 = vsel %vm84, %v83, %v81
    %87 = vrot.lane.b32.xlu0 %v62, 1
    %v88 = vpop.permute.xlu0 %87
    %89 = vrot.lane.b32.xlu0 %v63, 1
    %v90 = vpop.permute.xlu0 %89
    %vm91 = vcmp.lt.s32.totalorder %v69, 1
    %v92 = vsel %vm91, %v88, %v90
    %v93 = vsel %vm91, %v90, %v88
    %94 = vrot.lane.b32.xlu0 %v62, 127
    %v95 = vpop.permute.xlu0 %94
    %96 = vrot.lane.b32.xlu0 %v63, 127
    %v97 = vpop.permute.xlu0 %96
    %vm98 = vcmp.lt.s32.totalorder %v69, 127
    %v99 = vsel %vm98, %v95, %v97
    %v100 = vsel %vm98, %v97, %v95
    %101 = vrot.lane.b32.xlu0 %v62, 113
    %v102 = vpop.permute.xlu0 %101
    %103 = vrot.lane.b32.xlu0 %v63, 113
    %v104 = vpop.permute.xlu0 %103
    %vm105 = vcmp.lt.s32.totalorder %v69, 113
    %v106 = vsel %vm105, %v102, %v104
    %v107 = vsel %vm105, %v104, %v102
    %108 = vrot.lane.b32.xlu0 %v62, 112
    %v109 = vpop.permute.xlu0 %108
    %110 = vrot.lane.b32.xlu0 %v63, 112
    %v111 = vpop.permute.xlu0 %110
    %vm112 = vcmp.lt.s32.totalorder %v69, 112
    %v113 = vsel %vm112, %v109, %v111
    %v114 = vsel %vm112, %v111, %v109
    %115 = vrot.lane.b32.xlu0 %v62, 111
    %v116 = vpop.permute.xlu0 %115
    %117 = vrot.lane.b32.xlu0 %v63, 111
    %v118 = vpop.permute.xlu0 %117
    %vm119 = vcmp.lt.s32.totalorder %v69, 111
    %v120 = vsel %vm119, %v116, %v118
    %v121 = vsel %vm119, %v118, %v116
    %v122 = vld [vmem:[#allocation2] sm:$0xff]
    %v123 = vld [vmem:[#allocation2 + $0x8] sm:$0xff]
    %v124 = vld [vmem:[#allocation2 + $0x10] sm:$0xff]
    %v125 = vld [vmem:[#allocation2 + $0x18] sm:$0xff]
    %v126 = vld [vmem:[#allocation2 + $0x20] sm:$0xff]
    %v127 = vld [vmem:[#allocation2 + $0x28] sm:$0xff]
    %v128 = vld [vmem:[#allocation2 + $0x30] sm:$0xff]
    %v129 = vld [vmem:[#allocation2 + $0x38] sm:$0xff]
    %v130 = vld [vmem:[#allocation2 + $0x40] sm:$0xff]
    %v131 = vld [vmem:[#allocation2 + $0x48] sm:$0xff]
    %v132 = vld [vmem:[#allocation2 + $0x50] sm:$0xff]
    %v133 = vld [vmem:[#allocation2 + $0x58] sm:$0xff]
    %v134 = vld [vmem:[#allocation2 + $0x60] sm:$0xff]
    %v135 = vld [vmem:[#allocation2 + $0x68] sm:$0xff]
    %v136 = vld [vmem:[#allocation2 + $0x70] sm:$0xff]
    %v137 = vld [vmem:[#allocation2 + $0x78] sm:$0xff]
    %v138 = vld [vmem:[#allocation2 + $0x80] sm:$0xff]
    %v139 = vld [vmem:[#allocation2 + $0x88] sm:$0xff]
    %v140 = vmul.f32 %v72, %v122
    %v141 = vmul.f32 %v71, %v123
    %v142 = vmul.f32 %v79, %v124
    %v143 = vmul.f32 %v78, %v125
    %v144 = vmul.f32 %v86, %v126
    %v145 = vmul.f32 %v85, %v127
    %v146 = vmul.f32 %v93, %v128
    %v147 = vmul.f32 %v92, %v129
    %v148 = vmul.f32 %v62, %v130
    %v149 = vmul.f32 %v63, %v131
    %v150 = vmul.f32 %v99, %v132
    %v151 = vmul.f32 %v100, %v133
    %v152 = vmul.f32 %v106, %v134
    %v153 = vmul.f32 %v107, %v135
    %v154 = vmul.f32 %v113, %v136
    %v155 = vmul.f32 %v114, %v137
    %v156 = vmul.f32 %v120, %v138
    %v157 = vmul.f32 %v121, %v139
    %v158 = vld [vmem:[%s2] sm:$0xff]
    %v159 = vld [vmem:[%s3] sm:$0xff]
    %161 = vset.pattern.permute.xlu0 0
    %162 = vperm.xlu0 %161, %v159
    %v163 = vpop.permute.xlu0 %162
    %vm165 = vcmask 588800
    %v167 = vsel %vm165, %v158, 0
    %169 = vmatprep.subr.mxu0 0.0
    %170 = vmatpush1.msra.mxu0 0.0
    %171 = vmatprep.subr.mxu0 0.0
    %172 = vmatpush1.msra.mxu0 0.0
    %173 = vmatprep.subr.mxu0 0.0
    %174 = vmatpush1.msra.mxu0 0.0
    %175 = vmatprep.subr.mxu0 0.0
    %176 = vmatpush1.msra.mxu0 0.0
    %177 = vmatprep.subr.mxu0 0.0
    %178 = vmatpush1.msra.mxu0 0.0
    %179 = vmatprep.subr.mxu0 0.0
    %180 = vmatpush1.msra.mxu0 0.0
    %181 = vmatprep.subr.mxu0 0.0
    %182 = vmatpush1.msra.mxu0 0.0
    %183 = vmatprep.subr.mxu0 %v157
    %184 = vmatpush1.msra.mxu0 %v156
    %185 = vmatprep.subr.mxu0 %v155
    %186 = vmatpush1.msra.mxu0 %v154
    %187 = vmatprep.subr.mxu0 %v153
    %188 = vmatpush1.msra.mxu0 %v152
    %189 = vmatprep.subr.mxu0 %v151
    %190 = vmatpush1.msra.mxu0 %v150
    %191 = vmatprep.subr.mxu0 %v149
    %192 = vmatpush1.msra.mxu0 %v148
    %193 = vmatprep.subr.mxu0 %v147
    %194 = vmatpush1.msra.mxu0 %v146
    %195 = vmatprep.subr.mxu0 %v145
    %196 = vmatpush1.msra.mxu0 %v144
    %197 = vmatprep.subr.mxu0 %v143
    %198 = vmatpush1.msra.mxu0 %v142
    %199 = vmatprep.subr.mxu0 %v141
    %200 = vmatpush1.msra.mxu0 %v140
    %201 = vmatprep.subr.mxu0 0.0
    %202 = vmatpush2.msra.mxu0 0.0
    %203 = vmatprep.subr.mxu0 0.0
    %204 = vmatpush2.msra.mxu0 0.0
    %205 = vmatprep.subr.mxu0 0.0
    %206 = vmatpush2.msra.mxu0 0.0
    %207 = vmatprep.subr.mxu0 0.0
    %208 = vmatpush2.msra.mxu0 0.0
    %209 = vmatprep.subr.mxu0 0.0
    %210 = vmatpush2.msra.mxu0 0.0
    %211 = vmatprep.subr.mxu0 0.0
    %212 = vmatpush2.msra.mxu0 0.0
    %213 = vmatprep.subr.mxu0 0.0
    %214 = vmatpush2.msra.mxu0 0.0
    %215 = vmatprep.subr.mxu0 0.0
    %216 = vmatpush2.msra.mxu0 0.0
    %217 = vmatprep.subr.mxu0 0.0
    %218 = vmatpush2.msra.mxu0 0.0
    %219 = vmatprep.subr.mxu0 0.0
    %220 = vmatpush2.msra.mxu0 0.0
    %221 = vmatprep.subr.mxu0 0.0
    %222 = vmatpush2.msra.mxu0 0.0
    %223 = vmatprep.subr.mxu0 0.0
    %224 = vmatpush2.msra.mxu0 0.0
    %225 = vmatprep.subr.mxu0 0.0
    %226 = vmatpush2.msra.mxu0 0.0
    %227 = vmatprep.subr.mxu0 0.0
    %228 = vmatpush2.msra.mxu0 0.0
    %229 = vmatprep.subr.mxu0 0.0
    %230 = vmatpush2.msra.mxu0 0.0
    %231 = vmatprep.subr.mxu0 0.0
    %232 = vmatpush2.msra.mxu0 0.0
    %233 = vmatprep.mubr.f32.mxu0 0.0
    %234 = vmatmul.mubr.f32.gmra.mxu0 %v167
    %v235 = vpop.f32.mrf.mxu0
    %v236 = vadd.f32 %v163, %v235
    %v237 = vpop.f32.mrf.mxu0
    %v238 = vadd.f32 %v163, %v237
    %239 = vdwg.mxu0
    %v240 = vmul.f32 %v236, 0.01
    %v241 = vmul.f32 %v238, 0.01
    %v242 = vmax.f32 %v236, %v240
    %v243 = vmax.f32 %v238, %v241
    %244 = vrot.lane.b32.xlu0 %v242, 17
    %v245 = vpop.permute.xlu0 %244
    %246 = vrot.lane.b32.xlu0 %v243, 17
    %v247 = vpop.permute.xlu0 %246
    %v248 = vsel %vm70, %v245, %v247
    %v249 = vsel %vm70, %v247, %v245
    %250 = vrot.lane.b32.xlu0 %v242, 16
    %v251 = vpop.permute.xlu0 %250
    %252 = vrot.lane.b32.xlu0 %v243, 16
    %v253 = vpop.permute.xlu0 %252
    %v254 = vsel %vm77, %v251, %v253
    %v255 = vsel %vm77, %v253, %v251
    %256 = vrot.lane.b32.xlu0 %v242, 15
    %v257 = vpop.permute.xlu0 %256
    %258 = vrot.lane.b32.xlu0 %v243, 15
    %v259 = vpop.permute.xlu0 %258
    %v260 = vsel %vm84, %v257, %v259
    %v261 = vsel %vm84, %v259, %v257
    %262 = vrot.lane.b32.xlu0 %v242, 1
    %v263 = vpop.permute.xlu0 %262
    %264 = vrot.lane.b32.xlu0 %v243, 1
    %v265 = vpop.permute.xlu0 %264
    %v266 = vsel %vm91, %v263, %v265
    %v267 = vsel %vm91, %v265, %v263
    %268 = vrot.lane.b32.xlu0 %v242, 127
    %v269 = vpop.permute.xlu0 %268
    %270 = vrot.lane.b32.xlu0 %v243, 127
    %v271 = vpop.permute.xlu0 %270
    %v272 = vsel %vm98, %v269, %v271
    %v273 = vsel %vm98, %v271, %v269
    %274 = vrot.lane.b32.xlu0 %v242, 113
    %v275 = vpop.permute.xlu0 %274
    %276 = vrot.lane.b32.xlu0 %v243, 113
    %v277 = vpop.permute.xlu0 %276
    %v278 = vsel %vm105, %v275, %v277
    %v279 = vsel %vm105, %v277, %v275
    %280 = vrot.lane.b32.xlu0 %v242, 112
    %v281 = vpop.permute.xlu0 %280
    %282 = vrot.lane.b32.xlu0 %v243, 112
    %v283 = vpop.permute.xlu0 %282
    %v284 = vsel %vm112, %v281, %v283
    %v285 = vsel %vm112, %v283, %v281
    %286 = vrot.lane.b32.xlu0 %v242, 111
    %v287 = vpop.permute.xlu0 %286
    %288 = vrot.lane.b32.xlu0 %v243, 111
    %v289 = vpop.permute.xlu0 %288
    %v290 = vsel %vm119, %v287, %v289
    %v291 = vsel %vm119, %v289, %v287
    %v292 = vmul.f32 %v249, %v122
    %v293 = vmul.f32 %v248, %v123
    %v294 = vmul.f32 %v255, %v124
    %v295 = vmul.f32 %v254, %v125
    %v296 = vmul.f32 %v261, %v126
    %v297 = vmul.f32 %v260, %v127
    %v298 = vmul.f32 %v267, %v128
    %v299 = vmul.f32 %v266, %v129
    %v300 = vmul.f32 %v242, %v130
    %v301 = vmul.f32 %v243, %v131
    %v302 = vmul.f32 %v272, %v132
    %v303 = vmul.f32 %v273, %v133
    %v304 = vmul.f32 %v278, %v134
    %v305 = vmul.f32 %v279, %v135
    %v306 = vmul.f32 %v284, %v136
    %v307 = vmul.f32 %v285, %v137
    %v308 = vmul.f32 %v290, %v138
    %v309 = vmul.f32 %v291, %v139
    %s310 = scalar_lea.vmem %s2, 8
    %v311 = vld [vmem:[%s310] sm:$0xff]
    %s312 = scalar_lea.vmem %s3, 8
    %v313 = vld [vmem:[%s312] sm:$0xff]
    %315 = vset.pattern.permute.xlu0 0
    %316 = vperm.xlu0 %315, %v313
    %v317 = vpop.permute.xlu0 %316
    %v320 = vsel %vm165, %v311, 0
    %322 = vmatprep.subr.mxu0 0.0
    %323 = vmatpush1.msra.mxu0 0.0
    %324 = vmatprep.subr.mxu0 0.0
    %325 = vmatpush1.msra.mxu0 0.0
    %326 = vmatprep.subr.mxu0 0.0
    %327 = vmatpush1.msra.mxu0 0.0
    %328 = vmatprep.subr.mxu0 0.0
    %329 = vmatpush1.msra.mxu0 0.0
    %330 = vmatprep.subr.mxu0 0.0
    %331 = vmatpush1.msra.mxu0 0.0
    %332 = vmatprep.subr.mxu0 0.0
    %333 = vmatpush1.msra.mxu0 0.0
    %334 = vmatprep.subr.mxu0 0.0
    %335 = vmatpush1.msra.mxu0 0.0
    %336 = vmatprep.subr.mxu0 %v309
    %337 = vmatpush1.msra.mxu0 %v308
    %338 = vmatprep.subr.mxu0 %v307
    %339 = vmatpush1.msra.mxu0 %v306
    %340 = vmatprep.subr.mxu0 %v305
    %341 = vmatpush1.msra.mxu0 %v304
    %342 = vmatprep.subr.mxu0 %v303
    %343 = vmatpush1.msra.mxu0 %v302
    %344 = vmatprep.subr.mxu0 %v301
    %345 = vmatpush1.msra.mxu0 %v300
    %346 = vmatprep.subr.mxu0 %v299
    %347 = vmatpush1.msra.mxu0 %v298
    %348 = vmatprep.subr.mxu0 %v297
    %349 = vmatpush1.msra.mxu0 %v296
    %350 = vmatprep.subr.mxu0 %v295
    %351 = vmatpush1.msra.mxu0 %v294
    %352 = vmatprep.subr.mxu0 %v293
    %353 = vmatpush1.msra.mxu0 %v292
    %354 = vmatprep.subr.mxu0 0.0
    %355 = vmatpush2.msra.mxu0 0.0
    %356 = vmatprep.subr.mxu0 0.0
    %357 = vmatpush2.msra.mxu0 0.0
    %358 = vmatprep.subr.mxu0 0.0
    %359 = vmatpush2.msra.mxu0 0.0
    %360 = vmatprep.subr.mxu0 0.0
    %361 = vmatpush2.msra.mxu0 0.0
    %362 = vmatprep.subr.mxu0 0.0
    %363 = vmatpush2.msra.mxu0 0.0
    %364 = vmatprep.subr.mxu0 0.0
    %365 = vmatpush2.msra.mxu0 0.0
    %366 = vmatprep.subr.mxu0 0.0
    %367 = vmatpush2.msra.mxu0 0.0
    %368 = vmatprep.subr.mxu0 0.0
    %369 = vmatpush2.msra.mxu0 0.0
    %370 = vmatprep.subr.mxu0 0.0
    %371 = vmatpush2.msra.mxu0 0.0
    %372 = vmatprep.subr.mxu0 0.0
    %373 = vmatpush2.msra.mxu0 0.0
    %374 = vmatprep.subr.mxu0 0.0
    %375 = vmatpush2.msra.mxu0 0.0
    %376 = vmatprep.subr.mxu0 0.0
    %377 = vmatpush2.msra.mxu0 0.0
    %378 = vmatprep.subr.mxu0 0.0
    %379 = vmatpush2.msra.mxu0 0.0
    %380 = vmatprep.subr.mxu0 0.0
    %381 = vmatpush2.msra.mxu0 0.0
    %382 = vmatprep.subr.mxu0 0.0
    %383 = vmatpush2.msra.mxu0 0.0
    %384 = vmatprep.subr.mxu0 0.0
    %385 = vmatpush2.msra.mxu0 0.0
    %386 = vmatprep.mubr.f32.mxu0 0.0
    %387 = vmatmul.mubr.f32.gmra.mxu0 %v320
    %v388 = vpop.f32.mrf.mxu0
    %v389 = vadd.f32 %v317, %v388
    %v390 = vpop.f32.mrf.mxu0
    %v391 = vadd.f32 %v317, %v390
    %392 = vdwg.mxu0
    %v393 = vmul.f32 %v389, 0.01
    %v394 = vmul.f32 %v391, 0.01
    %v395 = vmax.f32 %v389, %v393
    %v396 = vmax.f32 %v391, %v394
    %397 = vrot.lane.b32.xlu0 %v395, 17
    %v398 = vpop.permute.xlu0 %397
    %399 = vrot.lane.b32.xlu0 %v396, 17
    %v400 = vpop.permute.xlu0 %399
    %v401 = vsel %vm70, %v398, %v400
    %v402 = vsel %vm70, %v400, %v398
    %403 = vrot.lane.b32.xlu0 %v395, 16
    %v404 = vpop.permute.xlu0 %403
    %405 = vrot.lane.b32.xlu0 %v396, 16
    %v406 = vpop.permute.xlu0 %405
    %v407 = vsel %vm77, %v404, %v406
    %v408 = vsel %vm77, %v406, %v404
    %409 = vrot.lane.b32.xlu0 %v395, 15
    %v410 = vpop.permute.xlu0 %409
    %411 = vrot.lane.b32.xlu0 %v396, 15
    %v412 = vpop.permute.xlu0 %411
    %v413 = vsel %vm84, %v410, %v412
    %v414 = vsel %vm84, %v412, %v410
    %415 = vrot.lane.b32.xlu0 %v395, 1
    %v416 = vpop.permute.xlu0 %415
    %417 = vrot.lane.b32.xlu0 %v396, 1
    %v418 = vpop.permute.xlu0 %417
    %v419 = vsel %vm91, %v416, %v418
    %v420 = vsel %vm91, %v418, %v416
    %421 = vrot.lane.b32.xlu0 %v395, 127
    %v422 = vpop.permute.xlu0 %421
    %423 = vrot.lane.b32.xlu0 %v396, 127
    %v424 = vpop.permute.xlu0 %423
    %v425 = vsel %vm98, %v422, %v424
    %v426 = vsel %vm98, %v424, %v422
    %427 = vrot.lane.b32.xlu0 %v395, 113
    %v428 = vpop.permute.xlu0 %427
    %429 = vrot.lane.b32.xlu0 %v396, 113
    %v430 = vpop.permute.xlu0 %429
    %v431 = vsel %vm105, %v428, %v430
    %v432 = vsel %vm105, %v430, %v428
    %433 = vrot.lane.b32.xlu0 %v395, 112
    %v434 = vpop.permute.xlu0 %433
    %435 = vrot.lane.b32.xlu0 %v396, 112
    %v436 = vpop.permute.xlu0 %435
    %v437 = vsel %vm112, %v434, %v436
    %v438 = vsel %vm112, %v436, %v434
    %439 = vrot.lane.b32.xlu0 %v395, 111
    %v440 = vpop.permute.xlu0 %439
    %441 = vrot.lane.b32.xlu0 %v396, 111
    %v442 = vpop.permute.xlu0 %441
    %v443 = vsel %vm119, %v440, %v442
    %v444 = vsel %vm119, %v442, %v440
    %v445 = vmul.f32 %v402, %v122
    %v446 = vmul.f32 %v401, %v123
    %v447 = vmul.f32 %v408, %v124
    %v448 = vmul.f32 %v407, %v125
    %v449 = vmul.f32 %v414, %v126
    %v450 = vmul.f32 %v413, %v127
    %v451 = vmul.f32 %v420, %v128
    %v452 = vmul.f32 %v419, %v129
    %v453 = vmul.f32 %v395, %v130
    %v454 = vmul.f32 %v396, %v131
    %v455 = vmul.f32 %v425, %v132
    %v456 = vmul.f32 %v426, %v133
    %v457 = vmul.f32 %v431, %v134
    %v458 = vmul.f32 %v432, %v135
    %v459 = vmul.f32 %v437, %v136
    %v460 = vmul.f32 %v438, %v137
    %v461 = vmul.f32 %v443, %v138
    %v462 = vmul.f32 %v444, %v139
    %s463 = scalar_lea.vmem %s2, 16
    %v464 = vld [vmem:[%s463] sm:$0xff]
    %s465 = scalar_lea.vmem %s3, 16
    %v466 = vld [vmem:[%s465] sm:$0xff]
    %468 = vset.pattern.permute.xlu0 0
    %469 = vperm.xlu0 %468, %v466
    %v470 = vpop.permute.xlu0 %469
    %v473 = vsel %vm165, %v464, 0
    %475 = vmatprep.subr.mxu0 0.0
    %476 = vmatpush1.msra.mxu0 0.0
    %477 = vmatprep.subr.mxu0 0.0
    %478 = vmatpush1.msra.mxu0 0.0
    %479 = vmatprep.subr.mxu0 0.0
    %480 = vmatpush1.msra.mxu0 0.0
    %481 = vmatprep.subr.mxu0 0.0
    %482 = vmatpush1.msra.mxu0 0.0
    %483 = vmatprep.subr.mxu0 0.0
    %484 = vmatpush1.msra.mxu0 0.0
    %485 = vmatprep.subr.mxu0 0.0
    %486 = vmatpush1.msra.mxu0 0.0
    %487 = vmatprep.subr.mxu0 0.0
    %488 = vmatpush1.msra.mxu0 0.0
    %489 = vmatprep.subr.mxu0 %v462
    %490 = vmatpush1.msra.mxu0 %v461
    %491 = vmatprep.subr.mxu0 %v460
    %492 = vmatpush1.msra.mxu0 %v459
    %493 = vmatprep.subr.mxu0 %v458
    %494 = vmatpush1.msra.mxu0 %v457
    %495 = vmatprep.subr.mxu0 %v456
    %496 = vmatpush1.msra.mxu0 %v455
    %497 = vmatprep.subr.mxu0 %v454
    %498 = vmatpush1.msra.mxu0 %v453
    %499 = vmatprep.subr.mxu0 %v452
    %500 = vmatpush1.msra.mxu0 %v451
    %501 = vmatprep.subr.mxu0 %v450
    %502 = vmatpush1.msra.mxu0 %v449
    %503 = vmatprep.subr.mxu0 %v448
    %504 = vmatpush1.msra.mxu0 %v447
    %505 = vmatprep.subr.mxu0 %v446
    %506 = vmatpush1.msra.mxu0 %v445
    %507 = vmatprep.subr.mxu0 0.0
    %508 = vmatpush2.msra.mxu0 0.0
    %509 = vmatprep.subr.mxu0 0.0
    %510 = vmatpush2.msra.mxu0 0.0
    %511 = vmatprep.subr.mxu0 0.0
    %512 = vmatpush2.msra.mxu0 0.0
    %513 = vmatprep.subr.mxu0 0.0
    %514 = vmatpush2.msra.mxu0 0.0
    %515 = vmatprep.subr.mxu0 0.0
    %516 = vmatpush2.msra.mxu0 0.0
    %517 = vmatprep.subr.mxu0 0.0
    %518 = vmatpush2.msra.mxu0 0.0
    %519 = vmatprep.subr.mxu0 0.0
    %520 = vmatpush2.msra.mxu0 0.0
    %521 = vmatprep.subr.mxu0 0.0
    %522 = vmatpush2.msra.mxu0 0.0
    %523 = vmatprep.subr.mxu0 0.0
    %524 = vmatpush2.msra.mxu0 0.0
    %525 = vmatprep.subr.mxu0 0.0
    %526 = vmatpush2.msra.mxu0 0.0
    %527 = vmatprep.subr.mxu0 0.0
    %528 = vmatpush2.msra.mxu0 0.0
    %529 = vmatprep.subr.mxu0 0.0
    %530 = vmatpush2.msra.mxu0 0.0
    %531 = vmatprep.subr.mxu0 0.0
    %532 = vmatpush2.msra.mxu0 0.0
    %533 = vmatprep.subr.mxu0 0.0
    %534 = vmatpush2.msra.mxu0 0.0
    %535 = vmatprep.subr.mxu0 0.0
    %536 = vmatpush2.msra.mxu0 0.0
    %537 = vmatprep.subr.mxu0 0.0
    %538 = vmatpush2.msra.mxu0 0.0
    %539 = vmatprep.mubr.f32.mxu0 0.0
    %540 = vmatmul.mubr.f32.gmra.mxu0 %v473
    %v541 = vpop.f32.mrf.mxu0
    %v542 = vadd.f32 %v470, %v541
    %v543 = vpop.f32.mrf.mxu0
    %v544 = vadd.f32 %v470, %v543
    %545 = vdwg.mxu0
    %v546 = vmul.f32 %v542, 0.01
    %v547 = vmul.f32 %v544, 0.01
    %v548 = vmax.f32 %v542, %v546
    %v549 = vmax.f32 %v544, %v547
    %550 = vrot.lane.b32.xlu0 %v548, 17
    %v551 = vpop.permute.xlu0 %550
    %552 = vrot.lane.b32.xlu0 %v549, 17
    %v553 = vpop.permute.xlu0 %552
    %v554 = vsel %vm70, %v551, %v553
    %v555 = vsel %vm70, %v553, %v551
    %556 = vrot.lane.b32.xlu0 %v548, 16
    %v557 = vpop.permute.xlu0 %556
    %558 = vrot.lane.b32.xlu0 %v549, 16
    %v559 = vpop.permute.xlu0 %558
    %v560 = vsel %vm77, %v557, %v559
    %v561 = vsel %vm77, %v559, %v557
    %562 = vrot.lane.b32.xlu0 %v548, 15
    %v563 = vpop.permute.xlu0 %562
    %564 = vrot.lane.b32.xlu0 %v549, 15
    %v565 = vpop.permute.xlu0 %564
    %v566 = vsel %vm84, %v563, %v565
    %v567 = vsel %vm84, %v565, %v563
    %568 = vrot.lane.b32.xlu0 %v548, 1
    %v569 = vpop.permute.xlu0 %568
    %570 = vrot.lane.b32.xlu0 %v549, 1
    %v571 = vpop.permute.xlu0 %570
    %v572 = vsel %vm91, %v569, %v571
    %v573 = vsel %vm91, %v571, %v569
    %574 = vrot.lane.b32.xlu0 %v548, 127
    %v575 = vpop.permute.xlu0 %574
    %576 = vrot.lane.b32.xlu0 %v549, 127
    %v577 = vpop.permute.xlu0 %576
    %v578 = vsel %vm98, %v575, %v577
    %v579 = vsel %vm98, %v577, %v575
    %580 = vrot.lane.b32.xlu0 %v548, 113
    %v581 = vpop.permute.xlu0 %580
    %582 = vrot.lane.b32.xlu0 %v549, 113
    %v583 = vpop.permute.xlu0 %582
    %v584 = vsel %vm105, %v581, %v583
    %v585 = vsel %vm105, %v583, %v581
    %586 = vrot.lane.b32.xlu0 %v548, 112
    %v587 = vpop.permute.xlu0 %586
    %588 = vrot.lane.b32.xlu0 %v549, 112
    %v589 = vpop.permute.xlu0 %588
    %v590 = vsel %vm112, %v587, %v589
    %v591 = vsel %vm112, %v589, %v587
    %592 = vrot.lane.b32.xlu0 %v548, 111
    %v593 = vpop.permute.xlu0 %592
    %594 = vrot.lane.b32.xlu0 %v549, 111
    %v595 = vpop.permute.xlu0 %594
    %v596 = vsel %vm119, %v593, %v595
    %v597 = vsel %vm119, %v595, %v593
    %v598 = vmul.f32 %v555, %v122
    %v599 = vmul.f32 %v554, %v123
    %v600 = vmul.f32 %v561, %v124
    %v601 = vmul.f32 %v560, %v125
    %v602 = vmul.f32 %v567, %v126
    %v603 = vmul.f32 %v566, %v127
    %v604 = vmul.f32 %v573, %v128
    %v605 = vmul.f32 %v572, %v129
    %v606 = vmul.f32 %v548, %v130
    %v607 = vmul.f32 %v549, %v131
    %v608 = vmul.f32 %v578, %v132
    %v609 = vmul.f32 %v579, %v133
    %v610 = vmul.f32 %v584, %v134
    %v611 = vmul.f32 %v585, %v135
    %v612 = vmul.f32 %v590, %v136
    %v613 = vmul.f32 %v591, %v137
    %v614 = vmul.f32 %v596, %v138
    %v615 = vmul.f32 %v597, %v139
    %s616 = scalar_lea.vmem %s2, 24
    %v617 = vld [vmem:[%s616] sm:$0xff]
    %s618 = scalar_lea.vmem %s3, 24
    %v619 = vld [vmem:[%s618] sm:$0xff]
    %621 = vset.pattern.permute.xlu0 0
    %622 = vperm.xlu0 %621, %v619
    %v623 = vpop.permute.xlu0 %622
    %v626 = vsel %vm165, %v617, 0
    %628 = vmatprep.subr.mxu0 0.0
    %629 = vmatpush1.msra.mxu0 0.0
    %630 = vmatprep.subr.mxu0 0.0
    %631 = vmatpush1.msra.mxu0 0.0
    %632 = vmatprep.subr.mxu0 0.0
    %633 = vmatpush1.msra.mxu0 0.0
    %634 = vmatprep.subr.mxu0 0.0
    %635 = vmatpush1.msra.mxu0 0.0
    %636 = vmatprep.subr.mxu0 0.0
    %637 = vmatpush1.msra.mxu0 0.0
    %638 = vmatprep.subr.mxu0 0.0
    %639 = vmatpush1.msra.mxu0 0.0
    %640 = vmatprep.subr.mxu0 0.0
    %641 = vmatpush1.msra.mxu0 0.0
    %642 = vmatprep.subr.mxu0 %v615
    %643 = vmatpush1.msra.mxu0 %v614
    %644 = vmatprep.subr.mxu0 %v613
    %645 = vmatpush1.msra.mxu0 %v612
    %646 = vmatprep.subr.mxu0 %v611
    %647 = vmatpush1.msra.mxu0 %v610
    %648 = vmatprep.subr.mxu0 %v609
    %649 = vmatpush1.msra.mxu0 %v608
    %650 = vmatprep.subr.mxu0 %v607
    %651 = vmatpush1.msra.mxu0 %v606
    %652 = vmatprep.subr.mxu0 %v605
    %653 = vmatpush1.msra.mxu0 %v604
    %654 = vmatprep.subr.mxu0 %v603
    %655 = vmatpush1.msra.mxu0 %v602
    %656 = vmatprep.subr.mxu0 %v601
    %657 = vmatpush1.msra.mxu0 %v600
    %658 = vmatprep.subr.mxu0 %v599
    %659 = vmatpush1.msra.mxu0 %v598
    %660 = vmatprep.subr.mxu0 0.0
    %661 = vmatpush2.msra.mxu0 0.0
    %662 = vmatprep.subr.mxu0 0.0
    %663 = vmatpush2.msra.mxu0 0.0
    %664 = vmatprep.subr.mxu0 0.0
    %665 = vmatpush2.msra.mxu0 0.0
    %666 = vmatprep.subr.mxu0 0.0
    %667 = vmatpush2.msra.mxu0 0.0
    %668 = vmatprep.subr.mxu0 0.0
    %669 = vmatpush2.msra.mxu0 0.0
    %670 = vmatprep.subr.mxu0 0.0
    %671 = vmatpush2.msra.mxu0 0.0
    %672 = vmatprep.subr.mxu0 0.0
    %673 = vmatpush2.msra.mxu0 0.0
    %674 = vmatprep.subr.mxu0 0.0
    %675 = vmatpush2.msra.mxu0 0.0
    %676 = vmatprep.subr.mxu0 0.0
    %677 = vmatpush2.msra.mxu0 0.0
    %678 = vmatprep.subr.mxu0 0.0
    %679 = vmatpush2.msra.mxu0 0.0
    %680 = vmatprep.subr.mxu0 0.0
    %681 = vmatpush2.msra.mxu0 0.0
    %682 = vmatprep.subr.mxu0 0.0
    %683 = vmatpush2.msra.mxu0 0.0
    %684 = vmatprep.subr.mxu0 0.0
    %685 = vmatpush2.msra.mxu0 0.0
    %686 = vmatprep.subr.mxu0 0.0
    %687 = vmatpush2.msra.mxu0 0.0
    %688 = vmatprep.subr.mxu0 0.0
    %689 = vmatpush2.msra.mxu0 0.0
    %690 = vmatprep.subr.mxu0 0.0
    %691 = vmatpush2.msra.mxu0 0.0
    %692 = vmatprep.mubr.f32.mxu0 0.0
    %693 = vmatmul.mubr.f32.gmra.mxu0 %v626
    %v694 = vpop.f32.mrf.mxu0
    %v695 = vadd.f32 %v623, %v694
    %v696 = vpop.f32.mrf.mxu0
    %v697 = vadd.f32 %v623, %v696
    %698 = vdwg.mxu0
    %s699 = smul.u32 0, 2
    %s700 = sld [smem:[#allocation8 + %s699]]
    %v701 = vstv %s700
    %v702 = vmul.f32 %v701, %v695
    %v703 = vmul.f32 %v701, %v697
    %s704 = ssub.f32 1.0, %s700
    %v705 = vstv %s704
    %v706 = vmul.f32 %v705, %v62
    %v707 = vmul.f32 %v705, %v63
    %v708 = vadd.f32 %v702, %v706
    %v709 = vadd.f32 %v703, %v707
    %v710 = vmul.f32 %v62, %v62
    %v711 = vmul.f32 %v63, %v63
    %v712 = vadd.f32 %v710, %v711
    %713 = vadd.xlane.f32.xlu0 %v712
    %v714 = vpop.xlane.xlu0 %713
    %v715 = vrot.slane %v714, 4
    %v716 = vadd.f32 %v714, %v715
    %v717 = vrot.slane %v716, 2
    %v718 = vadd.f32 %v716, %v717
    %v719 = vrot.slane %v718, 1
    %v720 = vadd.f32 %v718, %v719
    %s721 = vtos %v720
    %v722 = vstv %s721
    %v723 = vmul.f32 %v708, %v708
    %v724 = vmul.f32 %v709, %v709
    %v725 = vadd.f32 %v723, %v724
    %726 = vadd.xlane.f32.xlu0 %v725
    %v727 = vpop.xlane.xlu0 %726
    %v728 = vrot.slane %v727, 4
    %v729 = vadd.f32 %v727, %v728
    %v730 = vrot.slane %v729, 2
    %v731 = vadd.f32 %v729, %v730
    %v732 = vrot.slane %v731, 1
    %v733 = vadd.f32 %v731, %v732
    %s734 = vtos %v733
    %v735 = vstv %s734
    %v736 = vrsqrt.pop %v722
    %v737 = vmul.f32 %v722, %v736
    %vm738 = vcmp.eq.f32.partialorder %v722, inf
    %v739 = vsel %vm738, %v722, %v737
    %vm740 = vcmp.eq.f32.partialorder %v722, 0.0
    %v741 = vand.u32 %v722, 2147483648
    %v742 = vsel %vm740, %v741, %v739
    %v743 = vadd.f32 %v735, 1e-05
    %v744 = vrsqrt.pop %v743
    %v745 = vmul.f32 %v742, %v744
    %v746 = vmul.f32 %v708, %v745
    %v747 = vmul.f32 %v709, %v745
    %748 = vst [vmem:[#allocation9] sm:$0xff] %v746
    %749 = vst [vmem:[#allocation9 + $0x8] sm:$0xff] %v747
    %s750 = scalar_lea.vmem [#allocation6], 16
    %v751 = vld [vmem:[%s750] sm:$0xff]
    %v752 = vld [vmem:[%s750 + $0x8] sm:$0xff]
    %753 = vrot.lane.b32.xlu0 %v751, 17
    %v754 = vpop.permute.xlu0 %753
    %755 = vrot.lane.b32.xlu0 %v752, 17
    %v756 = vpop.permute.xlu0 %755
    %v757 = vsel %vm70, %v754, %v756
    %v758 = vsel %vm70, %v756, %v754
    %759 = vrot.lane.b32.xlu0 %v751, 16
    %v760 = vpop.permute.xlu0 %759
    %761 = vrot.lane.b32.xlu0 %v752, 16
    %v762 = vpop.permute.xlu0 %761
    %v763 = vsel %vm77, %v760, %v762
    %v764 = vsel %vm77, %v762, %v760
    %765 = vrot.lane.b32.xlu0 %v751, 15
    %v766 = vpop.permute.xlu0 %765
    %767 = vrot.lane.b32.xlu0 %v752, 15
    %v768 = vpop.permute.xlu0 %767
    %v769 = vsel %vm84, %v766, %v768
    %v770 = vsel %vm84, %v768, %v766
    %771 = vrot.lane.b32.xlu0 %v751, 1
    %v772 = vpop.permute.xlu0 %771
    %773 = vrot.lane.b32.xlu0 %v752, 1
    %v774 = vpop.permute.xlu0 %773
    %v775 = vsel %vm91, %v772, %v774
    %v776 = vsel %vm91, %v774, %v772
    %777 = vrot.lane.b32.xlu0 %v751, 127
    %v778 = vpop.permute.xlu0 %777
    %779 = vrot.lane.b32.xlu0 %v752, 127
    %v780 = vpop.permute.xlu0 %779
    %v781 = vsel %vm98, %v778, %v780
    %v782 = vsel %vm98, %v780, %v778
    %783 = vrot.lane.b32.xlu0 %v751, 113
    %v784 = vpop.permute.xlu0 %783
    %785 = vrot.lane.b32.xlu0 %v752, 113
    %v786 = vpop.permute.xlu0 %785
    %v787 = vsel %vm105, %v784, %v786
    %v788 = vsel %vm105, %v786, %v784
    %789 = vrot.lane.b32.xlu0 %v751, 112
    %v790 = vpop.permute.xlu0 %789
    %791 = vrot.lane.b32.xlu0 %v752, 112
    %v792 = vpop.permute.xlu0 %791
    %v793 = vsel %vm112, %v790, %v792
    %v794 = vsel %vm112, %v792, %v790
    %795 = vrot.lane.b32.xlu0 %v751, 111
    %v796 = vpop.permute.xlu0 %795
    %797 = vrot.lane.b32.xlu0 %v752, 111
    %v798 = vpop.permute.xlu0 %797
    %v799 = vsel %vm119, %v796, %v798
    %v800 = vsel %vm119, %v798, %v796
    %v801 = vld [vmem:[#allocation2] sm:$0xff]
    %v802 = vld [vmem:[#allocation2 + $0x8] sm:$0xff]
    %v803 = vld [vmem:[#allocation2 + $0x10] sm:$0xff]
    %v804 = vld [vmem:[#allocation2 + $0x18] sm:$0xff]
    %v805 = vld [vmem:[#allocation2 + $0x20] sm:$0xff]
    %v806 = vld [vmem:[#allocation2 + $0x28] sm:$0xff]
    %v807 = vld [vmem:[#allocation2 + $0x30] sm:$0xff]
    %v808 = vld [vmem:[#allocation2 + $0x38] sm:$0xff]
    %v809 = vld [vmem:[#allocation2 + $0x40] sm:$0xff]
    %v810 = vld [vmem:[#allocation2 + $0x48] sm:$0xff]
    %v811 = vld [vmem:[#allocation2 + $0x50] sm:$0xff]
    %v812 = vld [vmem:[#allocation2 + $0x58] sm:$0xff]
    %v813 = vld [vmem:[#allocation2 + $0x60] sm:$0xff]
    %v814 = vld [vmem:[#allocation2 + $0x68] sm:$0xff]
    %v815 = vld [vmem:[#allocation2 + $0x70] sm:$0xff]
    %v816 = vld [vmem:[#allocation2 + $0x78] sm:$0xff]
    %v817 = vld [vmem:[#allocation2 + $0x80] sm:$0xff]
    %v818 = vld [vmem:[#allocation2 + $0x88] sm:$0xff]
    %v819 = vmul.f32 %v758, %v801
    %v820 = vmul.f32 %v757, %v802
    %v821 = vmul.f32 %v764, %v803
    %v822 = vmul.f32 %v763, %v804
    %v823 = vmul.f32 %v770, %v805
    %v824 = vmul.f32 %v769, %v806
    %v825 = vmul.f32 %v776, %v807
    %v826 = vmul.f32 %v775, %v808
    %v827 = vmul.f32 %v751, %v809
    %v828 = vmul.f32 %v752, %v810
    %v829 = vmul.f32 %v781, %v811
    %v830 = vmul.f32 %v782, %v812
    %v831 = vmul.f32 %v787, %v813
    %v832 = vmul.f32 %v788, %v814
    %v833 = vmul.f32 %v793, %v815
    %v834 = vmul.f32 %v794, %v816
    %v835 = vmul.f32 %v799, %v817
    %v836 = vmul.f32 %v800, %v818
    %s837 = scalar_lea.vmem %s2, 32
    %v838 = vld [vmem:[%s837] sm:$0xff]
    %s839 = scalar_lea.vmem %s3, 32
    %v840 = vld [vmem:[%s839] sm:$0xff]
    %842 = vset.pattern.permute.xlu0 0
    %843 = vperm.xlu0 %842, %v840
    %v844 = vpop.permute.xlu0 %843
    %v847 = vsel %vm165, %v838, 0
    %849 = vmatprep.subr.mxu0 0.0
    %850 = vmatpush1.msra.mxu0 0.0
    %851 = vmatprep.subr.mxu0 0.0
    %852 = vmatpush1.msra.mxu0 0.0
    %853 = vmatprep.subr.mxu0 0.0
    %854 = vmatpush1.msra.mxu0 0.0
    %855 = vmatprep.subr.mxu0 0.0
    %856 = vmatpush1.msra.mxu0 0.0
    %857 = vmatprep.subr.mxu0 0.0
    %858 = vmatpush1.msra.mxu0 0.0
    %859 = vmatprep.subr.mxu0 0.0
    %860 = vmatpush1.msra.mxu0 0.0
    %861 = vmatprep.subr.mxu0 0.0
    %862 = vmatpush1.msra.mxu0 0.0
    %863 = vmatprep.subr.mxu0 %v836
    %864 = vmatpush1.msra.mxu0 %v835
    %865 = vmatprep.subr.mxu0 %v834
    %866 = vmatpush1.msra.mxu0 %v833
    %867 = vmatprep.subr.mxu0 %v832
    %868 = vmatpush1.msra.mxu0 %v831
    %869 = vmatprep.subr.mxu0 %v830
    %870 = vmatpush1.msra.mxu0 %v829
    %871 = vmatprep.subr.mxu0 %v828
    %872 = vmatpush1.msra.mxu0 %v827
    %873 = vmatprep.subr.mxu0 %v826
    %874 = vmatpush1.msra.mxu0 %v825
    %875 = vmatprep.subr.mxu0 %v824
    %876 = vmatpush1.msra.mxu0 %v823
    %877 = vmatprep.subr.mxu0 %v822
    %878 = vmatpush1.msra.mxu0 %v821
    %879 = vmatprep.subr.mxu0 %v820
    %880 = vmatpush1.msra.mxu0 %v819
    %881 = vmatprep.subr.mxu0 0.0
    %882 = vmatpush2.msra.mxu0 0.0
    %883 = vmatprep.subr.mxu0 0.0
    %884 = vmatpush2.msra.mxu0 0.0
    %885 = vmatprep.subr.mxu0 0.0
    %886 = vmatpush2.msra.mxu0 0.0
    %887 = vmatprep.subr.mxu0 0.0
    %888 = vmatpush2.msra.mxu0 0.0
    %889 = vmatprep.subr.mxu0 0.0
    %890 = vmatpush2.msra.mxu0 0.0
    %891 = vmatprep.subr.mxu0 0.0
    %892 = vmatpush2.msra.mxu0 0.0
    %893 = vmatprep.subr.mxu0 0.0
    %894 = vmatpush2.msra.mxu0 0.0
    %895 = vmatprep.subr.mxu0 0.0
    %896 = vmatpush2.msra.mxu0 0.0
    %897 = vmatprep.subr.mxu0 0.0
    %898 = vmatpush2.msra.mxu0 0.0
    %899 = vmatprep.subr.mxu0 0.0
    %900 = vmatpush2.msra.mxu0 0.0
    %901 = vmatprep.subr.mxu0 0.0
    %902 = vmatpush2.msra.mxu0 0.0
    %903 = vmatprep.subr.mxu0 0.0
    %904 = vmatpush2.msra.mxu0 0.0
    %905 = vmatprep.subr.mxu0 0.0
    %906 = vmatpush2.msra.mxu0 0.0
    %907 = vmatprep.subr.mxu0 0.0
    %908 = vmatpush2.msra.mxu0 0.0
    %909 = vmatprep.subr.mxu0 0.0
    %910 = vmatpush2.msra.mxu0 0.0
    %911 = vmatprep.subr.mxu0 0.0
    %912 = vmatpush2.msra.mxu0 0.0
    %913 = vmatprep.mubr.f32.mxu0 0.0
    %914 = vmatmul.mubr.f32.gmra.mxu0 %v847
    %v915 = vpop.f32.mrf.mxu0
    %v916 = vadd.f32 %v844, %v915
    %v917 = vpop.f32.mrf.mxu0
    %v918 = vadd.f32 %v844, %v917
    %919 = vdwg.mxu0
    %v920 = vmul.f32 %v916, 0.01
    %v921 = vmul.f32 %v918, 0.01
    %v922 = vmax.f32 %v916, %v920
    %v923 = vmax.f32 %v918, %v921
    %924 = vrot.lane.b32.xlu0 %v922, 17
    %v925 = vpop.permute.xlu0 %924
    %926 = vrot.lane.b32.xlu0 %v923, 17
    %v927 = vpop.permute.xlu0 %926
    %v928 = vsel %vm70, %v925, %v927
    %v929 = vsel %vm70, %v927, %v925
    %930 = vrot.lane.b32.xlu0 %v922, 16
    %v931 = vpop.permute.xlu0 %930
    %932 = vrot.lane.b32.xlu0 %v923, 16
    %v933 = vpop.permute.xlu0 %932
    %v934 = vsel %vm77, %v931, %v933
    %v935 = vsel %vm77, %v933, %v931
    %936 = vrot.lane.b32.xlu0 %v922, 15
    %v937 = vpop.permute.xlu0 %936
    %938 = vrot.lane.b32.xlu0 %v923, 15
    %v939 = vpop.permute.xlu0 %938
    %v940 = vsel %vm84, %v937, %v939
    %v941 = vsel %vm84, %v939, %v937
    %942 = vrot.lane.b32.xlu0 %v922, 1
    %v943 = vpop.permute.xlu0 %942
    %944 = vrot.lane.b32.xlu0 %v923, 1
    %v945 = vpop.permute.xlu0 %944
    %v946 = vsel %vm91, %v943, %v945
    %v947 = vsel %vm91, %v945, %v943
    %948 = vrot.lane.b32.xlu0 %v922, 127
    %v949 = vpop.permute.xlu0 %948
    %950 = vrot.lane.b32.xlu0 %v923, 127
    %v951 = vpop.permute.xlu0 %950
    %v952 = vsel %vm98, %v949, %v951
    %v953 = vsel %vm98, %v951, %v949
    %954 = vrot.lane.b32.xlu0 %v922, 113
    %v955 = vpop.permute.xlu0 %954
    %956 = vrot.lane.b32.xlu0 %v923, 113
    %v957 = vpop.permute.xlu0 %956
    %v958 = vsel %vm105, %v955, %v957
    %v959 = vsel %vm105, %v957, %v955
    %960 = vrot.lane.b32.xlu0 %v922, 112
    %v961 = vpop.permute.xlu0 %960
    %962 = vrot.lane.b32.xlu0 %v923, 112
    %v963 = vpop.permute.xlu0 %962
    %v964 = vsel %vm112, %v961, %v963
    %v965 = vsel %vm112, %v963, %v961
    %966 = vrot.lane.b32.xlu0 %v922, 111
    %v967 = vpop.permute.xlu0 %966
    %968 = vrot.lane.b32.xlu0 %v923, 111
    %v969 = vpop.permute.xlu0 %968
    %v970 = vsel %vm119, %v967, %v969
    %v971 = vsel %vm119, %v969, %v967
    %v972 = vmul.f32 %v929, %v801
    %v973 = vmul.f32 %v928, %v802
    %v974 = vmul.f32 %v935, %v803
    %v975 = vmul.f32 %v934, %v804
    %v976 = vmul.f32 %v941, %v805
    %v977 = vmul.f32 %v940, %v806
    %v978 = vmul.f32 %v947, %v807
    %v979 = vmul.f32 %v946, %v808
    %v980 = vmul.f32 %v922, %v809
    %v981 = vmul.f32 %v923, %v810
    %v982 = vmul.f32 %v952, %v811
    %v983 = vmul.f32 %v953, %v812
    %v984 = vmul.f32 %v958, %v813
    %v985 = vmul.f32 %v959, %v814
    %v986 = vmul.f32 %v964, %v815
    %v987 = vmul.f32 %v965, %v816
    %v988 = vmul.f32 %v970, %v817
    %v989 = vmul.f32 %v971, %v818
    %s990 = scalar_lea.vmem %s2, 40
    %v991 = vld [vmem:[%s990] sm:$0xff]
    %s992 = scalar_lea.vmem %s3, 40
    %v993 = vld [vmem:[%s992] sm:$0xff]
    %995 = vset.pattern.permute.xlu0 0
    %996 = vperm.xlu0 %995, %v993
    %v997 = vpop.permute.xlu0 %996
    %v1000 = vsel %vm165, %v991, 0
    %1002 = vmatprep.subr.mxu0 0.0
    %1003 = vmatpush1.msra.mxu0 0.0
    %1004 = vmatprep.subr.mxu0 0.0
    %1005 = vmatpush1.msra.mxu0 0.0
    %1006 = vmatprep.subr.mxu0 0.0
    %1007 = vmatpush1.msra.mxu0 0.0
    %1008 = vmatprep.subr.mxu0 0.0
    %1009 = vmatpush1.msra.mxu0 0.0
    %1010 = vmatprep.subr.mxu0 0.0
    %1011 = vmatpush1.msra.mxu0 0.0
    %1012 = vmatprep.subr.mxu0 0.0
    %1013 = vmatpush1.msra.mxu0 0.0
    %1014 = vmatprep.subr.mxu0 0.0
    %1015 = vmatpush1.msra.mxu0 0.0
    %1016 = vmatprep.subr.mxu0 %v989
    %1017 = vmatpush1.msra.mxu0 %v988
    %1018 = vmatprep.subr.mxu0 %v987
    %1019 = vmatpush1.msra.mxu0 %v986
    %1020 = vmatprep.subr.mxu0 %v985
    %1021 = vmatpush1.msra.mxu0 %v984
    %1022 = vmatprep.subr.mxu0 %v983
    %1023 = vmatpush1.msra.mxu0 %v982
    %1024 = vmatprep.subr.mxu0 %v981
    %1025 = vmatpush1.msra.mxu0 %v980
    %1026 = vmatprep.subr.mxu0 %v979
    %1027 = vmatpush1.msra.mxu0 %v978
    %1028 = vmatprep.subr.mxu0 %v977
    %1029 = vmatpush1.msra.mxu0 %v976
    %1030 = vmatprep.subr.mxu0 %v975
    %1031 = vmatpush1.msra.mxu0 %v974
    %1032 = vmatprep.subr.mxu0 %v973
    %1033 = vmatpush1.msra.mxu0 %v972
    %1034 = vmatprep.subr.mxu0 0.0
    %1035 = vmatpush2.msra.mxu0 0.0
    %1036 = vmatprep.subr.mxu0 0.0
    %1037 = vmatpush2.msra.mxu0 0.0
    %1038 = vmatprep.subr.mxu0 0.0
    %1039 = vmatpush2.msra.mxu0 0.0
    %1040 = vmatprep.subr.mxu0 0.0
    %1041 = vmatpush2.msra.mxu0 0.0
    %1042 = vmatprep.subr.mxu0 0.0
    %1043 = vmatpush2.msra.mxu0 0.0
    %1044 = vmatprep.subr.mxu0 0.0
    %1045 = vmatpush2.msra.mxu0 0.0
    %1046 = vmatprep.subr.mxu0 0.0
    %1047 = vmatpush2.msra.mxu0 0.0
    %1048 = vmatprep.subr.mxu0 0.0
    %1049 = vmatpush2.msra.mxu0 0.0
    %1050 = vmatprep.subr.mxu0 0.0
    %1051 = vmatpush2.msra.mxu0 0.0
    %1052 = vmatprep.subr.mxu0 0.0
    %1053 = vmatpush2.msra.mxu0 0.0
    %1054 = vmatprep.subr.mxu0 0.0
    %1055 = vmatpush2.msra.mxu0 0.0
    %1056 = vmatprep.subr.mxu0 0.0
    %1057 = vmatpush2.msra.mxu0 0.0
    %1058 = vmatprep.subr.mxu0 0.0
    %1059 = vmatpush2.msra.mxu0 0.0
    %1060 = vmatprep.subr.mxu0 0.0
    %1061 = vmatpush2.msra.mxu0 0.0
    %1062 = vmatprep.subr.mxu0 0.0
    %1063 = vmatpush2.msra.mxu0 0.0
    %1064 = vmatprep.subr.mxu0 0.0
    %1065 = vmatpush2.msra.mxu0 0.0
    %1066 = vmatprep.mubr.f32.mxu0 0.0
    %1067 = vmatmul.mubr.f32.gmra.mxu0 %v1000
    %v1068 = vpop.f32.mrf.mxu0
    %v1069 = vadd.f32 %v997, %v1068
    %v1070 = vpop.f32.mrf.mxu0
    %v1071 = vadd.f32 %v997, %v1070
    %1072 = vdwg.mxu0
    %v1073 = vmul.f32 %v1069, 0.01
    %v1074 = vmul.f32 %v1071, 0.01
    %v1075 = vmax.f32 %v1069, %v1073
    %v1076 = vmax.f32 %v1071, %v1074
    %1077 = vrot.lane.b32.xlu0 %v1075, 17
    %v1078 = vpop.permute.xlu0 %1077
    %1079 = vrot.lane.b32.xlu0 %v1076, 17
    %v1080 = vpop.permute.xlu0 %1079
    %v1081 = vsel %vm70, %v1078, %v1080
    %v1082 = vsel %vm70, %v1080, %v1078
    %1083 = vrot.lane.b32.xlu0 %v1075, 16
    %v1084 = vpop.permute.xlu0 %1083
    %1085 = vrot.lane.b32.xlu0 %v1076, 16
    %v1086 = vpop.permute.xlu0 %1085
    %v1087 = vsel %vm77, %v1084, %v1086
    %v1088 = vsel %vm77, %v1086, %v1084
    %1089 = vrot.lane.b32.xlu0 %v1075, 15
    %v1090 = vpop.permute.xlu0 %1089
    %1091 = vrot.lane.b32.xlu0 %v1076, 15
    %v1092 = vpop.permute.xlu0 %1091
    %v1093 = vsel %vm84, %v1090, %v1092
    %v1094 = vsel %vm84, %v1092, %v1090
    %1095 = vrot.lane.b32.xlu0 %v1075, 1
    %v1096 = vpop.permute.xlu0 %1095
    %1097 = vrot.lane.b32.xlu0 %v1076, 1
    %v1098 = vpop.permute.xlu0 %1097
    %v1099 = vsel %vm91, %v1096, %v1098
    %v1100 = vsel %vm91, %v1098, %v1096
    %1101 = vrot.lane.b32.xlu0 %v1075, 127
    %v1102 = vpop.permute.xlu0 %1101
    %1103 = vrot.lane.b32.xlu0 %v1076, 127
    %v1104 = vpop.permute.xlu0 %1103
    %v1105 = vsel %vm98, %v1102, %v1104
    %v1106 = vsel %vm98, %v1104, %v1102
    %1107 = vrot.lane.b32.xlu0 %v1075, 113
    %v1108 = vpop.permute.xlu0 %1107
    %1109 = vrot.lane.b32.xlu0 %v1076, 113
    %v1110 = vpop.permute.xlu0 %1109
    %v1111 = vsel %vm105, %v1108, %v1110
    %v1112 = vsel %vm105, %v1110, %v1108
    %1113 = vrot.lane.b32.xlu0 %v1075, 112
    %v1114 = vpop.permute.xlu0 %1113
    %1115 = vrot.lane.b32.xlu0 %v1076, 112
    %v1116 = vpop.permute.xlu0 %1115
    %v1117 = vsel %vm112, %v1114, %v1116
    %v1118 = vsel %vm112, %v1116, %v1114
    %1119 = vrot.lane.b32.xlu0 %v1075, 111
    %v1120 = vpop.permute.xlu0 %1119
    %1121 = vrot.lane.b32.xlu0 %v1076, 111
    %v1122 = vpop.permute.xlu0 %1121
    %v1123 = vsel %vm119, %v1120, %v1122
    %v1124 = vsel %vm119, %v1122, %v1120
    %v1125 = vmul.f32 %v1082, %v801
    %v1126 = vmul.f32 %v1081, %v802
    %v1127 = vmul.f32 %v1088, %v803
    %v1128 = vmul.f32 %v1087, %v804
    %v1129 = vmul.f32 %v1094, %v805
    %v1130 = vmul.f32 %v1093, %v806
    %v1131 = vmul.f32 %v1100, %v807
    %v1132 = vmul.f32 %v1099, %v808
    %v1133 = vmul.f32 %v1075, %v809
    %v1134 = vmul.f32 %v1076, %v810
    %v1135 = vmul.f32 %v1105, %v811
    %v1136 = vmul.f32 %v1106, %v812
    %v1137 = vmul.f32 %v1111, %v813
    %v1138 = vmul.f32 %v1112, %v814
    %v1139 = vmul.f32 %v1117, %v815
    %v1140 = vmul.f32 %v1118, %v816
    %v1141 = vmul.f32 %v1123, %v817
    %v1142 = vmul.f32 %v1124, %v818
    %s1143 = scalar_lea.vmem %s2, 48
    %v1144 = vld [vmem:[%s1143] sm:$0xff]
    %s1145 = scalar_lea.vmem %s3, 48
    %v1146 = vld [vmem:[%s1145] sm:$0xff]
    %1148 = vset.pattern.permute.xlu0 0
    %1149 = vperm.xlu0 %1148, %v1146
    %v1150 = vpop.permute.xlu0 %1149
    %v1153 = vsel %vm165, %v1144, 0
    %1155 = vmatprep.subr.mxu0 0.0
    %1156 = vmatpush1.msra.mxu0 0.0
    %1157 = vmatprep.subr.mxu0 0.0
    %1158 = vmatpush1.msra.mxu0 0.0
    %1159 = vmatprep.subr.mxu0 0.0
    %1160 = vmatpush1.msra.mxu0 0.0
    %1161 = vmatprep.subr.mxu0 0.0
    %1162 = vmatpush1.msra.mxu0 0.0
    %1163 = vmatprep.subr.mxu0 0.0
    %1164 = vmatpush1.msra.mxu0 0.0
    %1165 = vmatprep.subr.mxu0 0.0
    %1166 = vmatpush1.msra.mxu0 0.0
    %1167 = vmatprep.subr.mxu0 0.0
    %1168 = vmatpush1.msra.mxu0 0.0
    %1169 = vmatprep.subr.mxu0 %v1142
    %1170 = vmatpush1.msra.mxu0 %v1141
    %1171 = vmatprep.subr.mxu0 %v1140
    %1172 = vmatpush1.msra.mxu0 %v1139
    %1173 = vmatprep.subr.mxu0 %v1138
    %1174 = vmatpush1.msra.mxu0 %v1137
    %1175 = vmatprep.subr.mxu0 %v1136
    %1176 = vmatpush1.msra.mxu0 %v1135
    %1177 = vmatprep.subr.mxu0 %v1134
    %1178 = vmatpush1.msra.mxu0 %v1133
    %1179 = vmatprep.subr.mxu0 %v1132
    %1180 = vmatpush1.msra.mxu0 %v1131
    %1181 = vmatprep.subr.mxu0 %v1130
    %1182 = vmatpush1.msra.mxu0 %v1129
    %1183 = vmatprep.subr.mxu0 %v1128
    %1184 = vmatpush1.msra.mxu0 %v1127
    %1185 = vmatprep.subr.mxu0 %v1126
    %1186 = vmatpush1.msra.mxu0 %v1125
    %1187 = vmatprep.subr.mxu0 0.0
    %1188 = vmatpush2.msra.mxu0 0.0
    %1189 = vmatprep.subr.mxu0 0.0
    %1190 = vmatpush2.msra.mxu0 0.0
    %1191 = vmatprep.subr.mxu0 0.0
    %1192 = vmatpush2.msra.mxu0 0.0
    %1193 = vmatprep.subr.mxu0 0.0
    %1194 = vmatpush2.msra.mxu0 0.0
    %1195 = vmatprep.subr.mxu0 0.0
    %1196 = vmatpush2.msra.mxu0 0.0
    %1197 = vmatprep.subr.mxu0 0.0
    %1198 = vmatpush2.msra.mxu0 0.0
    %1199 = vmatprep.subr.mxu0 0.0
    %1200 = vmatpush2.msra.mxu0 0.0
    %1201 = vmatprep.subr.mxu0 0.0
    %1202 = vmatpush2.msra.mxu0 0.0
    %1203 = vmatprep.subr.mxu0 0.0
    %1204 = vmatpush2.msra.mxu0 0.0
    %1205 = vmatprep.subr.mxu0 0.0
    %1206 = vmatpush2.msra.mxu0 0.0
    %1207 = vmatprep.subr.mxu0 0.0
    %1208 = vmatpush2.msra.mxu0 0.0
    %1209 = vmatprep.subr.mxu0 0.0
    %1210 = vmatpush2.msra.mxu0 0.0
    %1211 = vmatprep.subr.mxu0 0.0
    %1212 = vmatpush2.msra.mxu0 0.0
    %1213 = vmatprep.subr.mxu0 0.0
    %1214 = vmatpush2.msra.mxu0 0.0
    %1215 = vmatprep.subr.mxu0 0.0
    %1216 = vmatpush2.msra.mxu0 0.0
    %1217 = vmatprep.subr.mxu0 0.0
    %1218 = vmatpush2.msra.mxu0 0.0
    %1219 = vmatprep.mubr.f32.mxu0 0.0
    %1220 = vmatmul.mubr.f32.gmra.mxu0 %v1153
    %v1221 = vpop.f32.mrf.mxu0
    %v1222 = vadd.f32 %v1150, %v1221
    %v1223 = vpop.f32.mrf.mxu0
    %v1224 = vadd.f32 %v1150, %v1223
    %1225 = vdwg.mxu0
    %v1226 = vmul.f32 %v1222, 0.01
    %v1227 = vmul.f32 %v1224, 0.01
    %v1228 = vmax.f32 %v1222, %v1226
    %v1229 = vmax.f32 %v1224, %v1227
    %1230 = vrot.lane.b32.xlu0 %v1228, 17
    %v1231 = vpop.permute.xlu0 %1230
    %1232 = vrot.lane.b32.xlu0 %v1229, 17
    %v1233 = vpop.permute.xlu0 %1232
    %v1234 = vsel %vm70, %v1231, %v1233
    %v1235 = vsel %vm70, %v1233, %v1231
    %1236 = vrot.lane.b32.xlu0 %v1228, 16
    %v1237 = vpop.permute.xlu0 %1236
    %1238 = vrot.lane.b32.xlu0 %v1229, 16
    %v1239 = vpop.permute.xlu0 %1238
    %v1240 = vsel %vm77, %v1237, %v1239
    %v1241 = vsel %vm77, %v1239, %v1237
    %1242 = vrot.lane.b32.xlu0 %v1228, 15
    %v1243 = vpop.permute.xlu0 %1242
    %1244 = vrot.lane.b32.xlu0 %v1229, 15
    %v1245 = vpop.permute.xlu0 %1244
    %v1246 = vsel %vm84, %v1243, %v1245
    %v1247 = vsel %vm84, %v1245, %v1243
    %1248 = vrot.lane.b32.xlu0 %v1228, 1
    %v1249 = vpop.permute.xlu0 %1248
    %1250 = vrot.lane.b32.xlu0 %v1229, 1
    %v1251 = vpop.permute.xlu0 %1250
    %v1252 = vsel %vm91, %v1249, %v1251
    %v1253 = vsel %vm91, %v1251, %v1249
    %1254 = vrot.lane.b32.xlu0 %v1228, 127
    %v1255 = vpop.permute.xlu0 %1254
    %1256 = vrot.lane.b32.xlu0 %v1229, 127
    %v1257 = vpop.permute.xlu0 %1256
    %v1258 = vsel %vm98, %v1255, %v1257
    %v1259 = vsel %vm98, %v1257, %v1255
    %1260 = vrot.lane.b32.xlu0 %v1228, 113
    %v1261 = vpop.permute.xlu0 %1260
    %1262 = vrot.lane.b32.xlu0 %v1229, 113
    %v1263 = vpop.permute.xlu0 %1262
    %v1264 = vsel %vm105, %v1261, %v1263
    %v1265 = vsel %vm105, %v1263, %v1261
    %1266 = vrot.lane.b32.xlu0 %v1228, 112
    %v1267 = vpop.permute.xlu0 %1266
    %1268 = vrot.lane.b32.xlu0 %v1229, 112
    %v1269 = vpop.permute.xlu0 %1268
    %v1270 = vsel %vm112, %v1267, %v1269
    %v1271 = vsel %vm112, %v1269, %v1267
    %1272 = vrot.lane.b32.xlu0 %v1228, 111
    %v1273 = vpop.permute.xlu0 %1272
    %1274 = vrot.lane.b32.xlu0 %v1229, 111
    %v1275 = vpop.permute.xlu0 %1274
    %v1276 = vsel %vm119, %v1273, %v1275
    %v1277 = vsel %vm119, %v1275, %v1273
    %v1278 = vmul.f32 %v1235, %v801
    %v1279 = vmul.f32 %v1234, %v802
    %v1280 = vmul.f32 %v1241, %v803
    %v1281 = vmul.f32 %v1240, %v804
    %v1282 = vmul.f32 %v1247, %v805
    %v1283 = vmul.f32 %v1246, %v806
    %v1284 = vmul.f32 %v1253, %v807
    %v1285 = vmul.f32 %v1252, %v808
    %v1286 = vmul.f32 %v1228, %v809
    %v1287 = vmul.f32 %v1229, %v810
    %v1288 = vmul.f32 %v1258, %v811
    %v1289 = vmul.f32 %v1259, %v812
    %v1290 = vmul.f32 %v1264, %v813
    %v1291 = vmul.f32 %v1265, %v814
    %v1292 = vmul.f32 %v1270, %v815
    %v1293 = vmul.f32 %v1271, %v816
    %v1294 = vmul.f32 %v1276, %v817
    %v1295 = vmul.f32 %v1277, %v818
    %s1296 = scalar_lea.vmem %s2, 56
    %v1297 = vld [vmem:[%s1296] sm:$0xff]
    %s1298 = scalar_lea.vmem %s3, 56
    %v1299 = vld [vmem:[%s1298] sm:$0xff]
    %1301 = vset.pattern.permute.xlu0 0
    %1302 = vperm.xlu0 %1301, %v1299
    %v1303 = vpop.permute.xlu0 %1302
    %v1306 = vsel %vm165, %v1297, 0
    %1308 = vmatprep.subr.mxu0 0.0
    %1309 = vmatpush1.msra.mxu0 0.0
    %1310 = vmatprep.subr.mxu0 0.0
    %1311 = vmatpush1.msra.mxu0 0.0
    %1312 = vmatprep.subr.mxu0 0.0
    %1313 = vmatpush1.msra.mxu0 0.0
    %1314 = vmatprep.subr.mxu0 0.0
    %1315 = vmatpush1.msra.mxu0 0.0
    %1316 = vmatprep.subr.mxu0 0.0
    %1317 = vmatpush1.msra.mxu0 0.0
    %1318 = vmatprep.subr.mxu0 0.0
    %1319 = vmatpush1.msra.mxu0 0.0
    %1320 = vmatprep.subr.mxu0 0.0
    %1321 = vmatpush1.msra.mxu0 0.0
    %1322 = vmatprep.subr.mxu0 %v1295
    %1323 = vmatpush1.msra.mxu0 %v1294
    %1324 = vmatprep.subr.mxu0 %v1293
    %1325 = vmatpush1.msra.mxu0 %v1292
    %1326 = vmatprep.subr.mxu0 %v1291
    %1327 = vmatpush1.msra.mxu0 %v1290
    %1328 = vmatprep.subr.mxu0 %v1289
    %1329 = vmatpush1.msra.mxu0 %v1288
    %1330 = vmatprep.subr.mxu0 %v1287
    %1331 = vmatpush1.msra.mxu0 %v1286
    %1332 = vmatprep.subr.mxu0 %v1285
    %1333 = vmatpush1.msra.mxu0 %v1284
    %1334 = vmatprep.subr.mxu0 %v1283
    %1335 = vmatpush1.msra.mxu0 %v1282
    %1336 = vmatprep.subr.mxu0 %v1281
    %1337 = vmatpush1.msra.mxu0 %v1280
    %1338 = vmatprep.subr.mxu0 %v1279
    %1339 = vmatpush1.msra.mxu0 %v1278
    %1340 = vmatprep.subr.mxu0 0.0
    %1341 = vmatpush2.msra.mxu0 0.0
    %1342 = vmatprep.subr.mxu0 0.0
    %1343 = vmatpush2.msra.mxu0 0.0
    %1344 = vmatprep.subr.mxu0 0.0
    %1345 = vmatpush2.msra.mxu0 0.0
    %1346 = vmatprep.subr.mxu0 0.0
    %1347 = vmatpush2.msra.mxu0 0.0
    %1348 = vmatprep.subr.mxu0 0.0
    %1349 = vmatpush2.msra.mxu0 0.0
    %1350 = vmatprep.subr.mxu0 0.0
    %1351 = vmatpush2.msra.mxu0 0.0
    %1352 = vmatprep.subr.mxu0 0.0
    %1353 = vmatpush2.msra.mxu0 0.0
    %1354 = vmatprep.subr.mxu0 0.0
    %1355 = vmatpush2.msra.mxu0 0.0
    %1356 = vmatprep.subr.mxu0 0.0
    %1357 = vmatpush2.msra.mxu0 0.0
    %1358 = vmatprep.subr.mxu0 0.0
    %1359 = vmatpush2.msra.mxu0 0.0
    %1360 = vmatprep.subr.mxu0 0.0
    %1361 = vmatpush2.msra.mxu0 0.0
    %1362 = vmatprep.subr.mxu0 0.0
    %1363 = vmatpush2.msra.mxu0 0.0
    %1364 = vmatprep.subr.mxu0 0.0
    %1365 = vmatpush2.msra.mxu0 0.0
    %1366 = vmatprep.subr.mxu0 0.0
    %1367 = vmatpush2.msra.mxu0 0.0
    %1368 = vmatprep.subr.mxu0 0.0
    %1369 = vmatpush2.msra.mxu0 0.0
    %1370 = vmatprep.subr.mxu0 0.0
    %1371 = vmatpush2.msra.mxu0 0.0
    %1372 = vmatprep.mubr.f32.mxu0 0.0
    %1373 = vmatmul.mubr.f32.gmra.mxu0 %v1306
    %v1374 = vpop.f32.mrf.mxu0
    %v1375 = vadd.f32 %v1303, %v1374
    %v1376 = vpop.f32.mrf.mxu0
    %v1377 = vadd.f32 %v1303, %v1376
    %1378 = vdwg.mxu0
    %s1379 = sadd.s32 %s699, 1
    %s1380 = sld [smem:[#allocation8 + %s1379]]
    %v1381 = vstv %s1380
    %v1382 = vmul.f32 %v1381, %v1375
    %v1383 = vmul.f32 %v1381, %v1377
    %s1384 = ssub.f32 1.0, %s1380
    %v1385 = vstv %s1384
    %v1386 = vmul.f32 %v1385, %v751
    %v1387 = vmul.f32 %v1385, %v752
    %v1388 = vadd.f32 %v1382, %v1386
    %v1389 = vadd.f32 %v1383, %v1387
    %v1390 = vmul.f32 %v751, %v751
    %v1391 = vmul.f32 %v752, %v752
    %v1392 = vadd.f32 %v1390, %v1391
    %1393 = vadd.xlane.f32.xlu0 %v1392
    %v1394 = vpop.xlane.xlu0 %1393
    %v1395 = vrot.slane %v1394, 4
    %v1396 = vadd.f32 %v1394, %v1395
    %v1397 = vrot.slane %v1396, 2
    %v1398 = vadd.f32 %v1396, %v1397
    %v1399 = vrot.slane %v1398, 1
    %v1400 = vadd.f32 %v1398, %v1399
    %s1401 = vtos %v1400
    %v1402 = vstv %s1401
    %v1403 = vmul.f32 %v1388, %v1388
    %v1404 = vmul.f32 %v1389, %v1389
    %v1405 = vadd.f32 %v1403, %v1404
    %1406 = vadd.xlane.f32.xlu0 %v1405
    %v1407 = vpop.xlane.xlu0 %1406
    %v1408 = vrot.slane %v1407, 4
    %v1409 = vadd.f32 %v1407, %v1408
    %v1410 = vrot.slane %v1409, 2
    %v1411 = vadd.f32 %v1409, %v1410
    %v1412 = vrot.slane %v1411, 1
    %v1413 = vadd.f32 %v1411, %v1412
    %s1414 = vtos %v1413
    %v1415 = vstv %s1414
    %v1416 = vrsqrt.pop %v1402
    %v1417 = vmul.f32 %v1402, %v1416
    %vm1418 = vcmp.eq.f32.partialorder %v1402, inf
    %v1419 = vsel %vm1418, %v1402, %v1417
    %vm1420 = vcmp.eq.f32.partialorder %v1402, 0.0
    %v1421 = vand.u32 %v1402, 2147483648
    %v1422 = vsel %vm1420, %v1421, %v1419
    %v1423 = vadd.f32 %v1415, 1e-05
    %v1424 = vrsqrt.pop %v1423
    %v1425 = vmul.f32 %v1422, %v1424
    %v1426 = vmul.f32 %v1388, %v1425
    %v1427 = vmul.f32 %v1389, %v1425
    %s1428 = scalar_lea.vmem [#allocation9], 16
    %1429 = vst [vmem:[%s1428] sm:$0xff] %v1426
    %1430 = vst [vmem:[%s1428 + $0x8] sm:$0xff] %v1427
    // Predicated region
    $region34: #{tpu_custom_call.1} parent=1 // pred_check
      _
    $region35: #{tpu_custom_call.1} parent=1 // pred_check_branch
      %1432 = sbr.rel (0) target = $region37
    $region36: #{tpu_custom_call.1} parent=1 // pred_region
      %s1434 = ssub.s32 512, 512
      %1435 = vsyncadd [#allocation4], %s1434
      %s1436 = sshll.u32 [#allocation9], 4
      %s1437 = int_to_ptr.vmem [resolvable:$true] %s1436
      %1442 = dma.vmem_to_hbm [thread:$0]  %s1437, 512, %s5, [#allocation4], 256, 256, 16
    $region37: #{tpu_custom_call.1} parent=1 // pred_fallthru
      _
    // Predicated region
    $region38: #{tpu_custom_call.1} parent=1 // pred_check
      _
    $region39: #{tpu_custom_call.1} parent=1 // pred_check_branch
      %1444 = sbr.rel (0) target = $region41
    $region40: #{tpu_custom_call.1} parent=1 // pred_region
      %1445 = dma.done [#allocation4], 512
    $region41: #{tpu_custom_call.1} parent=1 // pred_fallthru
      _
    %1446 = vsyncpa [#allocation3], 1
    %1447 = vsyncpa [#allocation7], 1
    %1448 = vsyncpa [#allocation4], 1
    %1449 = vsyncpa [#allocation5], 1

</llo_original>
